<compile_context>
chip_gen: v7x
topology: tpu7x:2x2x1
jax: 0.10.0
libtpu: 0.0.40
codegen_flags: <defaults>
</compile_context>

<pallas_src>
import jax
import jax.numpy as jnp
from jax.experimental import pallas as pl
from jax.experimental.pallas import tpu as pltpu

H = 128
W = 128
REND_DIM = 2      # skin + clothing render planes
REND_CH = 4       # RGBA channels from the renderer (alpha is never DMA'd)
MAX_BLOCK = 8     # max samples per grid step


# ---------------------------------------------------------------------------
# Pallas kernel: BS batch samples per grid step, four losses each.
# ---------------------------------------------------------------------------
def _make_kernel(bs, compute_basic, compute_ups):
    """Build a kernel for `bs` samples / step with dead branches statically removed."""

    def kernel(inv_dmax_ref,   # SMEM [B]            1 / max(clothing_dist) per sample
               rend_ref,       # VMEM [bs,2,3,H,W]   RGB renders (alpha dropped by BlockSpec)
               skin_gt_ref,    # VMEM [bs,H,W]       grph_skin_gt.mean(-1)
               dist_ref,       # VMEM [bs,H,W]       grph_clothing_dist_gt[...,0] (un-normalized)
               ssig_ref,       # VMEM [bs,1,H,W]     log(sigma^2) skin
               csig_ref,       # VMEM [bs,1,H,W]     log(sigma^2) clothing
               out_ref):       # SMEM [bs,4]         (basic_s, basic_c, ups_s, ups_c)
        f32 = jnp.float32
        inv_hw = 1.0 / (rend_ref.shape[-2] * rend_ref.shape[-1])
        base = pl.program_id(0) * bs

        for s in range(bs):  # static unroll over the samples of this block
            skin_pred = jnp.mean(rend_ref[s, 0].astype(f32), axis=0)    # pred[:3].mean(0)
            cloth_pred = jnp.mean(rend_ref[s, 1].astype(f32), axis=0)
            abs_diff = jnp.abs(skin_gt_ref[s].astype(f32) - skin_pred)
            # dist normalization fused in-kernel (scalar-broadcast VPU mul)
            pd = cloth_pred * (dist_ref[s].astype(f32) * inv_dmax_ref[base + s])

            if compute_basic:
                out_ref[s, 0] = jnp.sum(abs_diff) * inv_hw               # basic_s : nn.L1Loss()
                out_ref[s, 1] = jnp.sum(pd) * inv_hw                     # basic_c
            else:
                out_ref[s, 0] = f32(0.0)
                out_ref[s, 1] = f32(0.0)

            if compute_ups:
                # 1/sigma = 1/(exp(x/2)+1) = sigmoid(-x/2) = 0.5*(1+tanh(-x/4))
                # log(sigma) = -log(1/sigma)  -> 2 EUP passes per branch, 1 fused sum
                inv_ssig = 0.5 * (1.0 + jnp.tanh(ssig_ref[s, 0].astype(f32) * -0.25))
                out_ref[s, 2] = jnp.sum(abs_diff * inv_ssig - jnp.log(inv_ssig)) * inv_hw
                inv_csig = 0.5 * (1.0 + jnp.tanh(csig_ref[s, 0].astype(f32) * -0.25))
                out_ref[s, 3] = jnp.sum(pd * inv_csig - jnp.log(inv_csig)) * inv_hw
            else:
                out_ref[s, 2] = f32(0.0)
                out_ref[s, 3] = f32(0.0)

    return kernel


def _pick_block_size(b, max_bs=MAX_BLOCK):
    """Largest divisor of b that is <= max_bs (keeps all grid blocks full)."""
    for cand in range(min(max_bs, b), 0, -1):
        if b % cand == 0:
            return cand
    return 1


def _batched_losses(rend_out, skin_gt, dist0, inv_dmax, skin_sigma, cloth_sigma,
                    *, compute_basic, compute_ups):
    """Single batched pallas_call over all samples -> (B, 4) f32 per-sample losses."""
    b, rend_dim, ch, h, w = rend_out.shape
    bs = _pick_block_size(b)
    grid = (b // bs,)

    nbytes = lambda a: a.size * a.dtype.itemsize
    bytes_accessed = int(nbytes(rend_out) * 3 // ch         # only RGB planes are DMA'd
                         + nbytes(skin_gt) + nbytes(dist0)
                         + nbytes(skin_sigma) + nbytes(cloth_sigma)
                         + nbytes(inv_dmax) + b * 4 * 4)
    cost = pl.CostEstimate(
        flops=int(25 * b * h * w),
        transcendentals=int((4 if compute_ups else 0) * b * h * w),
        bytes_accessed=bytes_accessed)

    grid_spec = pltpu.PrefetchScalarGridSpec(
        num_scalar_prefetch=1,                 # inv_dmax -> SMEM, indexed per sample
        grid=grid,
        in_specs=[
            # block of 3 channels out of 4 at block index 0 drops alpha in the DMA itself
            pl.BlockSpec((bs, rend_dim, 3, h, w), lambda i, inv: (i, 0, 0, 0, 0)),
            pl.BlockSpec((bs, h, w), lambda i, inv: (i, 0, 0)),
            pl.BlockSpec((bs, h, w), lambda i, inv: (i, 0, 0)),
            pl.BlockSpec((bs, 1, h, w), lambda i, inv: (i, 0, 0, 0)),
            pl.BlockSpec((bs, 1, h, w), lambda i, inv: (i, 0, 0, 0)),
        ],
        out_specs=pl.BlockSpec((bs, 4), lambda i, inv: (i, 0),
                               memory_space=pltpu.MemorySpace.SMEM),
    )
    # TODO(synk): on v7x the batch grid axis could use pltpu.CORE_PARALLEL so both
    # TensorCores split the samples; "parallel" kept for portability across gens.
    return pl.pallas_call(
        _make_kernel(bs, compute_basic, compute_ups),
        out_shape=jax.ShapeDtypeStruct((b, 4), jnp.float32),
        grid_spec=grid_spec,
        compiler_params=pltpu.CompilerParams(
            dimension_semantics=("parallel",),
            vmem_limit_bytes=32 * 1024 * 1024),
        cost_estimate=cost,
    )(inv_dmax, rend_out, skin_gt, dist0, skin_sigma, cloth_sigma)


# ---------------------------------------------------------------------------
# JAX port of the UPS module (control flow / weighting = glue).
# ---------------------------------------------------------------------------
class UPS:
    def __init__(self, basic_s_weight=0.0, basic_c_weight=0.0,
                 ups_s_weight=0.1, ups_c_weight=0.1, ups_train_only=False):
        self.basic_s_weight = basic_s_weight
        self.basic_c_weight = basic_c_weight
        self.ups_s_weight = ups_s_weight
        self.ups_c_weight = ups_c_weight
        self.ups_train_only = ups_train_only
        # TODO(synk): `self.loss_weight` is referenced in forward() but never defined
        # in the original __init__; use 1.0 here.
        self.loss_weight = 1.0
        # TODO(synk): SMPL model / SoftRenderer / camera projection have no Pallas
        # equivalent; the rendered output `rend_out` is taken directly as input.
        # TODO(synk): pallas_call has no automatic VJP; if this loss is backpropagated
        # during training a jax.custom_vjp (or plain-JAX backward) must be added.

    def ups_losses(self, rend_out, skin_sigma, grph_skin_gt, grph_clothing_dist_gt,
                   clothing_sigma, grph_skin_valid_labels, grph_clothing_valid_labels,
                   smpl_segm_valid_idx, start_ups):
        zero = jnp.zeros((), jnp.float32)
        if not start_ups:
            return zero, zero, zero, zero

        batch_size = rend_out.shape[0]
        n_valid = len(smpl_segm_valid_idx)

        # glue (mirrors the torch preprocessing, trimmed to what the kernel consumes)
        skin_gt = jnp.mean(grph_skin_gt, axis=3).astype(jnp.float32)           # [B,H,W]
        dist0 = grph_clothing_dist_gt[..., 0].astype(jnp.float32)              # [B,H,W]
        inv_dmax = (1.0 / jnp.max(grph_clothing_dist_gt, axis=(1, 2, 3))       # [B]
                    ).astype(jnp.float32)

        compute_basic = (self.basic_s_weight != 0 and self.basic_c_weight != 0)
        compute_ups = (self.ups_s_weight != 0 and self.ups_c_weight != 0)

        losses = _batched_losses(rend_out, skin_gt, dist0, inv_dmax,
                                 skin_sigma, clothing_sigma,
                                 compute_basic=compute_basic,
                                 compute_ups=compute_ups)                      # (B, 4)
        bs_, bc_, us_, uc_ = (losses[:, j] for j in range(4))

        # static per-sample selection: sample is in the valid-idx set AND not
        # skipped (the torch `continue` when both valid-label lists are empty).
        sel = [False] * batch_size
        for i in smpl_segm_valid_idx:
            skip = (len(grph_skin_valid_labels[i]) == 0
                    and len(grph_clothing_valid_labels[i]) == 0)
            sel[i] = not skip
        sel = jnp.asarray(sel)

        # nan / inf guard: same (asymmetric) checks as the torch code; zeroes all four.
        bad = jnp.isnan(bs_) | jnp.isinf(bc_) | jnp.isinf(us_) | jnp.isinf(uc_)
        keep = sel & jnp.logical_not(bad)
        denom = float(n_valid)   # torch .mean() over the gathered (valid) subset
        mean = lambda v: jnp.sum(jnp.where(keep, v, 0.0)) / denom
        return mean(bs_), mean(bc_), mean(us_), mean(uc_)

    def forward(self, pred, gt, start_ups):
        rend_out = pred['rend_out']                          # [B, REND_DIM, 4, H, W]
        pred_skin_sigma = pred['pred_skin_sigma']            # [B, 1, H, W]
        pred_clothing_sigma = pred['pred_clothing_sigma']    # [B, 1, H, W]
        grph_skin_gt = gt['grph_skin_gt']                    # [B, H, W, 3]
        grph_clothing_dist_gt = gt['grph_clothing_dist_gt']  # [B, H, W, 3]
        grph_skin_valid_labels = gt['grph_skin_valid_labels']
        grph_clothing_valid_labels = gt['grph_clothing_valid_labels']

        smpl_segm_valid_idx = [i for i, h in enumerate(gt['has_smpl_skin_parts']) if h]

        if len(smpl_segm_valid_idx) != 0:
            # No rend_out[sel][:, :, :3] HBM->HBM gather copy: the kernel runs over
            # the full batch (alpha dropped by the BlockSpec), and the statically
            # known valid-sample mask / denominator are applied to the per-sample
            # scalar losses -- equivalent to the torch per-subset mean.
            loss_basic_s, loss_basic_c, loss_ups_s, loss_ups_c = self.ups_losses(
                rend_out, pred_skin_sigma, grph_skin_gt, grph_clothing_dist_gt,
                pred_clothing_sigma, grph_skin_valid_labels,
                grph_clothing_valid_labels, smpl_segm_valid_idx, start_ups)
        else:
            loss_basic_s = jnp.zeros((), jnp.float32)
            loss_basic_c = jnp.zeros((), jnp.float32)
            loss_ups_s = jnp.zeros((), jnp.float32)
            loss_ups_c = jnp.zeros((), jnp.float32)

        loss_basic_s = loss_basic_s * self.basic_s_weight
        loss_basic_c = loss_basic_c * self.basic_c_weight
        loss_ups_s = loss_ups_s * self.ups_s_weight
        loss_ups_c = loss_ups_c * self.ups_c_weight

        loss_dict = {
            'loss/loss_basic_s': loss_basic_s,
            'loss/loss_basic_c': loss_basic_c,
            'loss/loss_ups_s': loss_ups_s,
            'loss/loss_ups_c': loss_ups_c,
        }
        loss = sum(v for v in loss_dict.values())
        loss = loss * self.loss_weight
        loss_dict['loss/total_loss'] = loss
        return loss, loss_dict


# ---------------------------------------------------------------------------
# Pure-JAX reference (for correctness check of the Pallas kernel math)
# ---------------------------------------------------------------------------
def _ref_per_sample(rend4, skin_gt_hw3, dist_hw3, ssig_log, csig_log):
    target = skin_gt_hw3.mean(-1)
    skin_pred = rend4[0, :3].mean(0)
    basic_s = jnp.mean(jnp.abs(skin_pred - target))
    cloth_pred = rend4[1, :3].mean(0)
    dist0 = dist_hw3[..., 0] / jnp.max(dist_hw3)
    basic_c = jnp.mean(cloth_pred * dist0)
    ssig = jnp.exp(ssig_log[0] / 2) + 1
    ups_s = jnp.mean(jnp.abs(target - skin_pred) / ssig + jnp.log(ssig))
    csig = jnp.exp(csig_log[0] / 2) + 1
    ups_c = jnp.mean(cloth_pred * dist0 / csig + jnp.log(csig))
    return jnp.stack([basic_s, basic_c, ups_s, ups_c])


if __name__ == "__main__":
    B = 2
    key = jax.random.PRNGKey(0)
    k = jax.random.split(key, 5)

    # deterministic synthetic inputs (small shapes consistent with the forward)
    rend_out = jax.nn.sigmoid(
        jax.random.normal(k[0], (B, REND_DIM, REND_CH, H, W), jnp.float32))
    grph_skin_gt = jax.nn.sigmoid(jax.random.normal(k[1], (B, H, W, 3), jnp.float32))
    grph_clothing_dist_gt = jnp.abs(jax.random.normal(k[2], (B, H, W, 3), jnp.float32)) + 0.1
    pred_skin_sigma = 0.1 * jax.random.normal(k[3], (B, 1, H, W), jnp.float32)
    pred_clothing_sigma = 0.1 * jax.random.normal(k[4], (B, 1, H, W), jnp.float32)

    pred = {
        'rend_out': rend_out,
        'pred_skin_sigma': pred_skin_sigma,
        'pred_clothing_sigma': pred_clothing_sigma,
    }
    gt = {
        'imgname': [f'img_{i}.jpg' for i in range(B)],
        'grph_skin_gt': grph_skin_gt,
        'grph_clothing_dist_gt': grph_clothing_dist_gt,
        'grph_skin_valid_labels': [[1], [1]],
        'grph_clothing_valid_labels': [[2], [2]],
        'has_smpl_skin_parts': [True, True],
    }

    # non-zero basic weights so all four loss paths are exercised
    model = UPS(basic_s_weight=0.01, basic_c_weight=0.01,
                ups_s_weight=0.1, ups_c_weight=0.1)
    loss, loss_dict = model.forward(pred, gt, start_ups=True)
    loss = jax.block_until_ready(loss)

    # sanity check: batched kernel vs pure-JAX reference (per sample).
    skin_gt_m = jnp.mean(grph_skin_gt, axis=3)
    dist0 = grph_clothing_dist_gt[..., 0]
    inv_dmax = 1.0 / jnp.max(grph_clothing_dist_gt, axis=(1, 2, 3))
    got = _batched_losses(rend_out, skin_gt_m, dist0, inv_dmax,
                          pred_skin_sigma, pred_clothing_sigma,
                          compute_basic=True, compute_ups=True)
    got = jax.block_until_ready(got)
    want = jnp.stack([
        _ref_per_sample(rend_out[i], grph_skin_gt[i], grph_clothing_dist_gt[i],
                        pred_skin_sigma[i], pred_clothing_sigma[i])
        for i in range(B)])
    assert jnp.allclose(got, want, rtol=2e-3, atol=2e-3), (got, want)
    assert bool(jnp.isfinite(loss)), loss

    print("KERNEL_OK")
</pallas_src>

<mosaic_0001>
module attributes {stable_mosaic.version = 11 : i64} {
  func.func @kernel(%arg0: i32, %arg1: memref<2xf32, #tpu.memory_space<smem>>, %arg2: memref<2x2x3x128x128xf32, #tpu.memory_space<vmem>>, %arg3: memref<2x128x128xf32, #tpu.memory_space<vmem>>, %arg4: memref<2x128x128xf32, #tpu.memory_space<vmem>>, %arg5: memref<2x1x128x128xf32, #tpu.memory_space<vmem>>, %arg6: memref<2x1x128x128xf32, #tpu.memory_space<vmem>>, %arg7: memref<2x4xf32, #tpu.memory_space<smem>>) attributes {dimension_semantics = [#tpu.dimension_semantics<parallel>], iteration_bounds = array<i64: 1>, scalar_prefetch = 1 : i64, scratch_operands = 0 : i64, tpu.core_type = #tpu.core_type<tc>, window_params = [{transform_indices = @transform_0, window_bounds = array<i64: 2, 2, 3, 128, 128>}, {transform_indices = @transform_1, window_bounds = array<i64: 2, 128, 128>}, {transform_indices = @transform_2, window_bounds = array<i64: 2, 128, 128>}, {transform_indices = @transform_3, window_bounds = array<i64: 2, 1, 128, 128>}, {transform_indices = @transform_4, window_bounds = array<i64: 2, 1, 128, 128>}, {transform_indices = @transform_5, window_bounds = array<i64: 2, 4>}]} {
    %c2_i32 = arith.constant 2 : i32
    %0 = arith.muli %arg0, %c2_i32 : i32
    %c0 = arith.constant 0 : index
    %c0_0 = arith.constant 0 : index
    %c0_1 = arith.constant 0 : index
    %c0_2 = arith.constant 0 : index
    %c0_3 = arith.constant 0 : index
    %1 = vector.load %arg2[%c0, %c0_0, %c0_1, %c0_2, %c0_3] : memref<2x2x3x128x128xf32, #tpu.memory_space<vmem>>, vector<1x1x3x128x128xf32>
    %2 = vector.shape_cast %1 : vector<1x1x3x128x128xf32> to vector<3x128x128xf32>
    %cst = arith.constant dense<0.000000e+00> : vector<128x128xf32>
    %3 = vector.multi_reduction <add>, %2, %cst [0] : vector<3x128x128xf32> to vector<128x128xf32>
    %cst_4 = arith.constant 3.000000e+00 : f32
    %4 = vector.broadcast %cst_4 : f32 to vector<128x128xf32>
    %5 = arith.divf %3, %4 : vector<128x128xf32>
    %c0_5 = arith.constant 0 : index
    %c1 = arith.constant 1 : index
    %c0_6 = arith.constant 0 : index
    %c0_7 = arith.constant 0 : index
    %c0_8 = arith.constant 0 : index
    %6 = vector.load %arg2[%c0_5, %c1, %c0_6, %c0_7, %c0_8] : memref<2x2x3x128x128xf32, #tpu.memory_space<vmem>>, vector<1x1x3x128x128xf32>
    %7 = vector.shape_cast %6 : vector<1x1x3x128x128xf32> to vector<3x128x128xf32>
    %cst_9 = arith.constant dense<0.000000e+00> : vector<128x128xf32>
    %8 = vector.multi_reduction <add>, %7, %cst_9 [0] : vector<3x128x128xf32> to vector<128x128xf32>
    %cst_10 = arith.constant 3.000000e+00 : f32
    %9 = vector.broadcast %cst_10 : f32 to vector<128x128xf32>
    %10 = arith.divf %8, %9 : vector<128x128xf32>
    %c0_11 = arith.constant 0 : index
    %c0_12 = arith.constant 0 : index
    %c0_13 = arith.constant 0 : index
    %11 = vector.load %arg3[%c0_11, %c0_12, %c0_13] : memref<2x128x128xf32, #tpu.memory_space<vmem>>, vector<1x128x128xf32>
    %12 = vector.shape_cast %11 : vector<1x128x128xf32> to vector<128x128xf32>
    %13 = arith.subf %12, %5 : vector<128x128xf32>
    %14 = math.absf %13 : vector<128x128xf32>
    %c0_14 = arith.constant 0 : index
    %c0_15 = arith.constant 0 : index
    %c0_16 = arith.constant 0 : index
    %15 = vector.load %arg4[%c0_14, %c0_15, %c0_16] : memref<2x128x128xf32, #tpu.memory_space<vmem>>, vector<1x128x128xf32>
    %16 = vector.shape_cast %15 : vector<1x128x128xf32> to vector<128x128xf32>
    %c0_i32 = arith.constant 0 : i32
    %17 = arith.addi %0, %c0_i32 : i32
    %18 = arith.index_cast %17 : i32 to index
    %19 = memref.load %arg1[%18] : memref<2xf32, #tpu.memory_space<smem>>
    %20 = vector.broadcast %19 : f32 to vector<128x128xf32>
    %21 = arith.mulf %16, %20 : vector<128x128xf32>
    %22 = arith.mulf %10, %21 : vector<128x128xf32>
    %23 = vector.shape_cast %14 : vector<128x128xf32> to vector<1x128x128xf32>
    %cst_17 = arith.constant dense<0.000000e+00> : vector<1xf32>
    %24 = vector.multi_reduction <add>, %23, %cst_17 [1, 2] : vector<1x128x128xf32> to vector<1xf32>
    %25 = vector.shape_cast %24 : vector<1xf32> to vector<1x1x1xf32>
    %26 = vector.extract %25[0, 0, 0] : f32 from vector<1x1x1xf32>
    %cst_18 = arith.constant 6.10351563E-5 : f32
    %27 = arith.mulf %26, %cst_18 : f32
    %c0_19 = arith.constant 0 : index
    %c0_20 = arith.constant 0 : index
    %28 = memref.load %arg7[%c0_19, %c0_20] : memref<2x4xf32, #tpu.memory_space<smem>>
    memref.store %27, %arg7[%c0_19, %c0_20] : memref<2x4xf32, #tpu.memory_space<smem>>
    %29 = vector.shape_cast %22 : vector<128x128xf32> to vector<1x128x128xf32>
    %cst_21 = arith.constant dense<0.000000e+00> : vector<1xf32>
    %30 = vector.multi_reduction <add>, %29, %cst_21 [1, 2] : vector<1x128x128xf32> to vector<1xf32>
    %31 = vector.shape_cast %30 : vector<1xf32> to vector<1x1x1xf32>
    %32 = vector.extract %31[0, 0, 0] : f32 from vector<1x1x1xf32>
    %cst_22 = arith.constant 6.10351563E-5 : f32
    %33 = arith.mulf %32, %cst_22 : f32
    %c0_23 = arith.constant 0 : index
    %c1_24 = arith.constant 1 : index
    %34 = memref.load %arg7[%c0_23, %c1_24] : memref<2x4xf32, #tpu.memory_space<smem>>
    memref.store %33, %arg7[%c0_23, %c1_24] : memref<2x4xf32, #tpu.memory_space<smem>>
    %c0_25 = arith.constant 0 : index
    %c0_26 = arith.constant 0 : index
    %c0_27 = arith.constant 0 : index
    %c0_28 = arith.constant 0 : index
    %35 = vector.load %arg5[%c0_25, %c0_26, %c0_27, %c0_28] : memref<2x1x128x128xf32, #tpu.memory_space<vmem>>, vector<1x1x128x128xf32>
    %36 = vector.shape_cast %35 : vector<1x1x128x128xf32> to vector<128x128xf32>
    %cst_29 = arith.constant -2.500000e-01 : f32
    %37 = vector.broadcast %cst_29 : f32 to vector<128x128xf32>
    %38 = arith.mulf %36, %37 : vector<128x128xf32>
    %39 = math.tanh %38 : vector<128x128xf32>
    %cst_30 = arith.constant 1.000000e+00 : f32
    %40 = vector.broadcast %cst_30 : f32 to vector<128x128xf32>
    %41 = arith.addf %40, %39 : vector<128x128xf32>
    %cst_31 = arith.constant 5.000000e-01 : f32
    %42 = vector.broadcast %cst_31 : f32 to vector<128x128xf32>
    %43 = arith.mulf %42, %41 : vector<128x128xf32>
    %44 = arith.mulf %14, %43 : vector<128x128xf32>
    %45 = math.log %43 : vector<128x128xf32>
    %46 = arith.subf %44, %45 : vector<128x128xf32>
    %47 = vector.shape_cast %46 : vector<128x128xf32> to vector<1x128x128xf32>
    %cst_32 = arith.constant dense<0.000000e+00> : vector<1xf32>
    %48 = vector.multi_reduction <add>, %47, %cst_32 [1, 2] : vector<1x128x128xf32> to vector<1xf32>
    %49 = vector.shape_cast %48 : vector<1xf32> to vector<1x1x1xf32>
    %50 = vector.extract %49[0, 0, 0] : f32 from vector<1x1x1xf32>
    %cst_33 = arith.constant 6.10351563E-5 : f32
    %51 = arith.mulf %50, %cst_33 : f32
    %c0_34 = arith.constant 0 : index
    %c2 = arith.constant 2 : index
    %52 = memref.load %arg7[%c0_34, %c2] : memref<2x4xf32, #tpu.memory_space<smem>>
    memref.store %51, %arg7[%c0_34, %c2] : memref<2x4xf32, #tpu.memory_space<smem>>
    %c0_35 = arith.constant 0 : index
    %c0_36 = arith.constant 0 : index
    %c0_37 = arith.constant 0 : index
    %c0_38 = arith.constant 0 : index
    %53 = vector.load %arg6[%c0_35, %c0_36, %c0_37, %c0_38] : memref<2x1x128x128xf32, #tpu.memory_space<vmem>>, vector<1x1x128x128xf32>
    %54 = vector.shape_cast %53 : vector<1x1x128x128xf32> to vector<128x128xf32>
    %cst_39 = arith.constant -2.500000e-01 : f32
    %55 = vector.broadcast %cst_39 : f32 to vector<128x128xf32>
    %56 = arith.mulf %54, %55 : vector<128x128xf32>
    %57 = math.tanh %56 : vector<128x128xf32>
    %cst_40 = arith.constant 1.000000e+00 : f32
    %58 = vector.broadcast %cst_40 : f32 to vector<128x128xf32>
    %59 = arith.addf %58, %57 : vector<128x128xf32>
    %cst_41 = arith.constant 5.000000e-01 : f32
    %60 = vector.broadcast %cst_41 : f32 to vector<128x128xf32>
    %61 = arith.mulf %60, %59 : vector<128x128xf32>
    %62 = arith.mulf %22, %61 : vector<128x128xf32>
    %63 = math.log %61 : vector<128x128xf32>
    %64 = arith.subf %62, %63 : vector<128x128xf32>
    %65 = vector.shape_cast %64 : vector<128x128xf32> to vector<1x128x128xf32>
    %cst_42 = arith.constant dense<0.000000e+00> : vector<1xf32>
    %66 = vector.multi_reduction <add>, %65, %cst_42 [1, 2] : vector<1x128x128xf32> to vector<1xf32>
    %67 = vector.shape_cast %66 : vector<1xf32> to vector<1x1x1xf32>
    %68 = vector.extract %67[0, 0, 0] : f32 from vector<1x1x1xf32>
    %cst_43 = arith.constant 6.10351563E-5 : f32
    %69 = arith.mulf %68, %cst_43 : f32
    %c0_44 = arith.constant 0 : index
    %c3 = arith.constant 3 : index
    %70 = memref.load %arg7[%c0_44, %c3] : memref<2x4xf32, #tpu.memory_space<smem>>
    memref.store %69, %arg7[%c0_44, %c3] : memref<2x4xf32, #tpu.memory_space<smem>>
    %c1_45 = arith.constant 1 : index
    %c0_46 = arith.constant 0 : index
    %c0_47 = arith.constant 0 : index
    %c0_48 = arith.constant 0 : index
    %c0_49 = arith.constant 0 : index
    %71 = vector.load %arg2[%c1_45, %c0_46, %c0_47, %c0_48, %c0_49] : memref<2x2x3x128x128xf32, #tpu.memory_space<vmem>>, vector<1x1x3x128x128xf32>
    %72 = vector.shape_cast %71 : vector<1x1x3x128x128xf32> to vector<3x128x128xf32>
    %cst_50 = arith.constant dense<0.000000e+00> : vector<128x128xf32>
    %73 = vector.multi_reduction <add>, %72, %cst_50 [0] : vector<3x128x128xf32> to vector<128x128xf32>
    %cst_51 = arith.constant 3.000000e+00 : f32
    %74 = vector.broadcast %cst_51 : f32 to vector<128x128xf32>
    %75 = arith.divf %73, %74 : vector<128x128xf32>
    %c1_52 = arith.constant 1 : index
    %c1_53 = arith.constant 1 : index
    %c0_54 = arith.constant 0 : index
    %c0_55 = arith.constant 0 : index
    %c0_56 = arith.constant 0 : index
    %76 = vector.load %arg2[%c1_52, %c1_53, %c0_54, %c0_55, %c0_56] : memref<2x2x3x128x128xf32, #tpu.memory_space<vmem>>, vector<1x1x3x128x128xf32>
    %77 = vector.shape_cast %76 : vector<1x1x3x128x128xf32> to vector<3x128x128xf32>
    %cst_57 = arith.constant dense<0.000000e+00> : vector<128x128xf32>
    %78 = vector.multi_reduction <add>, %77, %cst_57 [0] : vector<3x128x128xf32> to vector<128x128xf32>
    %cst_58 = arith.constant 3.000000e+00 : f32
    %79 = vector.broadcast %cst_58 : f32 to vector<128x128xf32>
    %80 = arith.divf %78, %79 : vector<128x128xf32>
    %c1_59 = arith.constant 1 : index
    %c0_60 = arith.constant 0 : index
    %c0_61 = arith.constant 0 : index
    %81 = vector.load %arg3[%c1_59, %c0_60, %c0_61] : memref<2x128x128xf32, #tpu.memory_space<vmem>>, vector<1x128x128xf32>
    %82 = vector.shape_cast %81 : vector<1x128x128xf32> to vector<128x128xf32>
    %83 = arith.subf %82, %75 : vector<128x128xf32>
    %84 = math.absf %83 : vector<128x128xf32>
    %c1_62 = arith.constant 1 : index
    %c0_63 = arith.constant 0 : index
    %c0_64 = arith.constant 0 : index
    %85 = vector.load %arg4[%c1_62, %c0_63, %c0_64] : memref<2x128x128xf32, #tpu.memory_space<vmem>>, vector<1x128x128xf32>
    %86 = vector.shape_cast %85 : vector<1x128x128xf32> to vector<128x128xf32>
    %c1_i32 = arith.constant 1 : i32
    %87 = arith.addi %0, %c1_i32 : i32
    %88 = arith.index_cast %87 : i32 to index
    %89 = memref.load %arg1[%88] : memref<2xf32, #tpu.memory_space<smem>>
    %90 = vector.broadcast %89 : f32 to vector<128x128xf32>
    %91 = arith.mulf %86, %90 : vector<128x128xf32>
    %92 = arith.mulf %80, %91 : vector<128x128xf32>
    %93 = vector.shape_cast %84 : vector<128x128xf32> to vector<1x128x128xf32>
    %cst_65 = arith.constant dense<0.000000e+00> : vector<1xf32>
    %94 = vector.multi_reduction <add>, %93, %cst_65 [1, 2] : vector<1x128x128xf32> to vector<1xf32>
    %95 = vector.shape_cast %94 : vector<1xf32> to vector<1x1x1xf32>
    %96 = vector.extract %95[0, 0, 0] : f32 from vector<1x1x1xf32>
    %cst_66 = arith.constant 6.10351563E-5 : f32
    %97 = arith.mulf %96, %cst_66 : f32
    %c1_67 = arith.constant 1 : index
    %c0_68 = arith.constant 0 : index
    %98 = memref.load %arg7[%c1_67, %c0_68] : memref<2x4xf32, #tpu.memory_space<smem>>
    memref.store %97, %arg7[%c1_67, %c0_68] : memref<2x4xf32, #tpu.memory_space<smem>>
    %99 = vector.shape_cast %92 : vector<128x128xf32> to vector<1x128x128xf32>
    %cst_69 = arith.constant dense<0.000000e+00> : vector<1xf32>
    %100 = vector.multi_reduction <add>, %99, %cst_69 [1, 2] : vector<1x128x128xf32> to vector<1xf32>
    %101 = vector.shape_cast %100 : vector<1xf32> to vector<1x1x1xf32>
    %102 = vector.extract %101[0, 0, 0] : f32 from vector<1x1x1xf32>
    %cst_70 = arith.constant 6.10351563E-5 : f32
    %103 = arith.mulf %102, %cst_70 : f32
    %c1_71 = arith.constant 1 : index
    %c1_72 = arith.constant 1 : index
    %104 = memref.load %arg7[%c1_71, %c1_72] : memref<2x4xf32, #tpu.memory_space<smem>>
    memref.store %103, %arg7[%c1_71, %c1_72] : memref<2x4xf32, #tpu.memory_space<smem>>
    %c1_73 = arith.constant 1 : index
    %c0_74 = arith.constant 0 : index
    %c0_75 = arith.constant 0 : index
    %c0_76 = arith.constant 0 : index
    %105 = vector.load %arg5[%c1_73, %c0_74, %c0_75, %c0_76] : memref<2x1x128x128xf32, #tpu.memory_space<vmem>>, vector<1x1x128x128xf32>
    %106 = vector.shape_cast %105 : vector<1x1x128x128xf32> to vector<128x128xf32>
    %cst_77 = arith.constant -2.500000e-01 : f32
    %107 = vector.broadcast %cst_77 : f32 to vector<128x128xf32>
    %108 = arith.mulf %106, %107 : vector<128x128xf32>
    %109 = math.tanh %108 : vector<128x128xf32>
    %cst_78 = arith.constant 1.000000e+00 : f32
    %110 = vector.broadcast %cst_78 : f32 to vector<128x128xf32>
    %111 = arith.addf %110, %109 : vector<128x128xf32>
    %cst_79 = arith.constant 5.000000e-01 : f32
    %112 = vector.broadcast %cst_79 : f32 to vector<128x128xf32>
    %113 = arith.mulf %112, %111 : vector<128x128xf32>
    %114 = arith.mulf %84, %113 : vector<128x128xf32>
    %115 = math.log %113 : vector<128x128xf32>
    %116 = arith.subf %114, %115 : vector<128x128xf32>
    %117 = vector.shape_cast %116 : vector<128x128xf32> to vector<1x128x128xf32>
    %cst_80 = arith.constant dense<0.000000e+00> : vector<1xf32>
    %118 = vector.multi_reduction <add>, %117, %cst_80 [1, 2] : vector<1x128x128xf32> to vector<1xf32>
    %119 = vector.shape_cast %118 : vector<1xf32> to vector<1x1x1xf32>
    %120 = vector.extract %119[0, 0, 0] : f32 from vector<1x1x1xf32>
    %cst_81 = arith.constant 6.10351563E-5 : f32
    %121 = arith.mulf %120, %cst_81 : f32
    %c1_82 = arith.constant 1 : index
    %c2_83 = arith.constant 2 : index
    %122 = memref.load %arg7[%c1_82, %c2_83] : memref<2x4xf32, #tpu.memory_space<smem>>
    memref.store %121, %arg7[%c1_82, %c2_83] : memref<2x4xf32, #tpu.memory_space<smem>>
    %c1_84 = arith.constant 1 : index
    %c0_85 = arith.constant 0 : index
    %c0_86 = arith.constant 0 : index
    %c0_87 = arith.constant 0 : index
    %123 = vector.load %arg6[%c1_84, %c0_85, %c0_86, %c0_87] : memref<2x1x128x128xf32, #tpu.memory_space<vmem>>, vector<1x1x128x128xf32>
    %124 = vector.shape_cast %123 : vector<1x1x128x128xf32> to vector<128x128xf32>
    %cst_88 = arith.constant -2.500000e-01 : f32
    %125 = vector.broadcast %cst_88 : f32 to vector<128x128xf32>
    %126 = arith.mulf %124, %125 : vector<128x128xf32>
    %127 = math.tanh %126 : vector<128x128xf32>
    %cst_89 = arith.constant 1.000000e+00 : f32
    %128 = vector.broadcast %cst_89 : f32 to vector<128x128xf32>
    %129 = arith.addf %128, %127 : vector<128x128xf32>
    %cst_90 = arith.constant 5.000000e-01 : f32
    %130 = vector.broadcast %cst_90 : f32 to vector<128x128xf32>
    %131 = arith.mulf %130, %129 : vector<128x128xf32>
    %132 = arith.mulf %92, %131 : vector<128x128xf32>
    %133 = math.log %131 : vector<128x128xf32>
    %134 = arith.subf %132, %133 : vector<128x128xf32>
    %135 = vector.shape_cast %134 : vector<128x128xf32> to vector<1x128x128xf32>
    %cst_91 = arith.constant dense<0.000000e+00> : vector<1xf32>
    %136 = vector.multi_reduction <add>, %135, %cst_91 [1, 2] : vector<1x128x128xf32> to vector<1xf32>
    %137 = vector.shape_cast %136 : vector<1xf32> to vector<1x1x1xf32>
    %138 = vector.extract %137[0, 0, 0] : f32 from vector<1x1x1xf32>
    %cst_92 = arith.constant 6.10351563E-5 : f32
    %139 = arith.mulf %138, %cst_92 : f32
    %c1_93 = arith.constant 1 : index
    %c3_94 = arith.constant 3 : index
    %140 = memref.load %arg7[%c1_93, %c3_94] : memref<2x4xf32, #tpu.memory_space<smem>>
    memref.store %139, %arg7[%c1_93, %c3_94] : memref<2x4xf32, #tpu.memory_space<smem>>
    return
  }
  func.func @transform_0(%arg0: i32, %arg1: memref<2xf32, #tpu.memory_space<smem>>) -> (i32, i32, i32, i32, i32) {
    %c0_i32 = arith.constant 0 : i32
    %c0_i32_0 = arith.constant 0 : i32
    %c0_i32_1 = arith.constant 0 : i32
    %c0_i32_2 = arith.constant 0 : i32
    %c0_i32_3 = arith.constant 0 : i32
    return %arg0, %c0_i32, %c0_i32_0, %c0_i32_1, %c0_i32_2 : i32, i32, i32, i32, i32
  }
  func.func @transform_1(%arg0: i32, %arg1: memref<2xf32, #tpu.memory_space<smem>>) -> (i32, i32, i32) {
    %c0_i32 = arith.constant 0 : i32
    %c0_i32_0 = arith.constant 0 : i32
    %c0_i32_1 = arith.constant 0 : i32
    return %arg0, %c0_i32, %c0_i32_0 : i32, i32, i32
  }
  func.func @transform_2(%arg0: i32, %arg1: memref<2xf32, #tpu.memory_space<smem>>) -> (i32, i32, i32) {
    %c0_i32 = arith.constant 0 : i32
    %c0_i32_0 = arith.constant 0 : i32
    %c0_i32_1 = arith.constant 0 : i32
    return %arg0, %c0_i32, %c0_i32_0 : i32, i32, i32
  }
  func.func @transform_3(%arg0: i32, %arg1: memref<2xf32, #tpu.memory_space<smem>>) -> (i32, i32, i32, i32) {
    %c0_i32 = arith.constant 0 : i32
    %c0_i32_0 = arith.constant 0 : i32
    %c0_i32_1 = arith.constant 0 : i32
    %c0_i32_2 = arith.constant 0 : i32
    return %arg0, %c0_i32, %c0_i32_0, %c0_i32_1 : i32, i32, i32, i32
  }
  func.func @transform_4(%arg0: i32, %arg1: memref<2xf32, #tpu.memory_space<smem>>) -> (i32, i32, i32, i32) {
    %c0_i32 = arith.constant 0 : i32
    %c0_i32_0 = arith.constant 0 : i32
    %c0_i32_1 = arith.constant 0 : i32
    %c0_i32_2 = arith.constant 0 : i32
    return %arg0, %c0_i32, %c0_i32_0, %c0_i32_1 : i32, i32, i32, i32
  }
  func.func @transform_5(%arg0: i32, %arg1: memref<2xf32, #tpu.memory_space<smem>>) -> (i32, i32) {
    %c0_i32 = arith.constant 0 : i32
    %c0_i32_0 = arith.constant 0 : i32
    return %arg0, %c0_i32 : i32, i32
  }
}

</mosaic_0001>

<llo_original>
// kernel: tpu_custom_call.1
$region0: #{tpu_custom_call.1}
  #allocation0 [shape = 'u32[]', space=smem, size = 0x4, offset = 0x4, fixed_abs, tag = 'smem constant byte address 0x4 - core index']
  #allocation1 [shape = 'u32[144,128]{1,0:T(1,128)}', space=vmem, size = 0x12000, scoped, tag = 'internal scratch']
  #allocation2 [shape = 's32[1]{0}', space=sflag, size = 0x4, scoped, tag = 'scoped memory for tpu_custom_call.1']
  #allocation3 [shape = 'u8[512]{0}', space=smem, size = 0x200, scoped, tag = 'prefetched SMEM operand 0']
  #allocation14 [shape = 's32[]', space=sflag, size = 0x4, offset = 0, fixed_abs, tag = 'sflag constant byte address 0x0 - dummy sync flag']
  %s0 = inlined_call_operand.hbm [shape: f32[2], index: 0, kind: input, shape index: {}]
  %s1 = inlined_call_operand.hbm [shape: f32[2,2,4,128,128], index: 1, kind: input, shape index: {}]
  %s2 = inlined_call_operand.hbm [shape: f32[2,128,128], index: 2, kind: input, shape index: {}]
  %s3 = inlined_call_operand.hbm [shape: f32[2,128,128], index: 3, kind: input, shape index: {}]
  %s4 = inlined_call_operand.hbm [shape: f32[2,1,128,128], index: 4, kind: input, shape index: {}]
  %s5 = inlined_call_operand.hbm [shape: f32[2,1,128,128], index: 5, kind: input, shape index: {}]
  %s6 = inlined_call_operand.hbm [shape: f32[2,4], index: 6, kind: output, shape index: {}]
  %s7 = sld [smem:[#allocation0]]
  $region50: #{tpu_custom_call.1} parent=0
    _
  %s9 = ssub.s32 1, %s7
  %s10 = scalar_select 0, %s9, %s7
  %12 = dma.hbm_to_smem %s0, 16, [#allocation3], [#allocation2]
  %13 = dma.done [#allocation2], 16
  %14 = sfence
  $region1: #{tpu_custom_call.1} parent=0
    #allocation4 [shape = 'u8[786432]{0}', space=vmem, size = 0xc0000, scoped, tag = 'input window, operand 1, single buffered']
    #allocation5 [shape = 's32[1]{0}', space=sflag, size = 0x4, scoped, tag = 'scoped memory for tpu_custom_call.1']
    #allocation6 [shape = 's32[1]{0}', space=sflag, size = 0x4, scoped, tag = 'scoped memory for tpu_custom_call.1']
    #allocation7 [shape = 'u8[131072]{0}', space=vmem, size = 0x20000, scoped, tag = 'input window, operand 2, single buffered']
    #allocation8 [shape = 's32[1]{0}', space=sflag, size = 0x4, scoped, tag = 'scoped memory for tpu_custom_call.1']
    #allocation9 [shape = 'u8[131072]{0}', space=vmem, size = 0x20000, scoped, tag = 'input window, operand 3, single buffered']
    #allocation10 [shape = 'u8[131072]{0}', space=vmem, size = 0x20000, scoped, tag = 'input window, operand 4, single buffered']
    #allocation11 [shape = 's32[1]{0}', space=sflag, size = 0x4, scoped, tag = 'scoped memory for tpu_custom_call.1']
    #allocation12 [shape = 'u8[131072]{0}', space=vmem, size = 0x20000, scoped, tag = 'input window, operand 5, single buffered']
    #allocation13 [shape = 'u8[1024]{0}', space=smem, size = 0x400, scoped, tag = 'output window, operand 0, single buffered']
    %15 = vsyncpa [#allocation5], 0
    %16 = vsyncpa [#allocation8], 0
    %17 = vsyncpa [#allocation11], 0
    %18 = vsyncpa [#allocation6], 0
    // Predicated region
    $region2: #{tpu_custom_call.1} parent=1 // pred_check
      _
    $region3: #{tpu_custom_call.1} parent=1 // pred_check_branch
      %20 = sbr.rel (0) target = $region5
    $region4: #{tpu_custom_call.1} parent=1 // pred_region
      #allocation15 [shape = 'u32[6]{0}', space=smem, size = 0x18, scoped, tag = 'DMA stride descriptor']
      %s22 = ssub.s32 24576, 24576
      %23 = vsyncadd [#allocation5], %s22
      %s25 = sshll.u32 1, 14
      %s26 = sxor.u32 4294967295, %s25
      %s28 = sld [smem:[#allocation0]]
      %s29 = sadd.s32 2, %s28
      %s31 = sshll.u32 7, 26
      %s32 = sxor.u32 4294967295, %s31
      %s33 = sand.u32 0, %s32
      %s34 = sshll.u32 %s29, 26
      %s35 = sor.u32 %s33, %s34
      %s36 = sshll.u32 [#allocation4], 4
      %s37 = int_to_ptr.vmem [resolvable:$true] %s36
      %43 = sst [smem:[#allocation15]] 8192
      %s44 = scalar_lea.smem [#allocation15], 1
      %45 = sst [smem:[%s44]] 6144
      %s46 = scalar_lea.smem [#allocation15], 2
      %47 = sst [smem:[%s46]] 48
      %s48 = scalar_lea.smem [#allocation15], 3
      %49 = sst [smem:[%s48]] 128
      %s50 = scalar_lea.smem [#allocation15], 4
      %51 = sst [smem:[%s50]] 128
      %s52 = scalar_lea.smem [#allocation15], 5
      %53 = sst [smem:[%s52]] 8
      %55 = dma.general %s1, 24576, %s37, [#allocation5], [#allocation14], [#allocation15], %s35, 0
    $region5: #{tpu_custom_call.1} parent=1 // pred_fallthru
      _
    // Predicated region
    $region6: #{tpu_custom_call.1} parent=1 // pred_check
      _
    $region7: #{tpu_custom_call.1} parent=1 // pred_check_branch
      %57 = sbr.rel (0) target = $region9
    $region8: #{tpu_custom_call.1} parent=1 // pred_region
      %s59 = ssub.s32 4096, 4096
      %60 = vsyncadd [#allocation8], %s59
      %s61 = sshll.u32 [#allocation7], 4
      %s62 = int_to_ptr.vmem [resolvable:$true] %s61
      %67 = dma.hbm_to_vmem [thread:$0]  %s2, 4096, %s62, [#allocation8], 128, 128, 8
    $region9: #{tpu_custom_call.1} parent=1 // pred_fallthru
      _
    // Predicated region
    $region10: #{tpu_custom_call.1} parent=1 // pred_check
      _
    $region11: #{tpu_custom_call.1} parent=1 // pred_check_branch
      %69 = sbr.rel (0) target = $region13
    $region12: #{tpu_custom_call.1} parent=1 // pred_region
      %s71 = ssub.s32 4096, 4096
      %72 = vsyncadd [#allocation8], %s71
      %s73 = sshll.u32 [#allocation9], 4
      %s74 = int_to_ptr.vmem [resolvable:$true] %s73
      %79 = dma.hbm_to_vmem [thread:$0]  %s3, 4096, %s74, [#allocation8], 128, 128, 8
    $region13: #{tpu_custom_call.1} parent=1 // pred_fallthru
      _
    // Predicated region
    $region14: #{tpu_custom_call.1} parent=1 // pred_check
      _
    $region15: #{tpu_custom_call.1} parent=1 // pred_check_branch
      %81 = sbr.rel (0) target = $region17
    $region16: #{tpu_custom_call.1} parent=1 // pred_region
      %s83 = ssub.s32 4096, 4096
      %84 = vsyncadd [#allocation11], %s83
      %s85 = sshll.u32 [#allocation10], 4
      %s86 = int_to_ptr.vmem [resolvable:$true] %s85
      %91 = dma.hbm_to_vmem [thread:$0]  %s4, 4096, %s86, [#allocation11], 128, 128, 8
    $region17: #{tpu_custom_call.1} parent=1 // pred_fallthru
      _
    // Predicated region
    $region18: #{tpu_custom_call.1} parent=1 // pred_check
      _
    $region19: #{tpu_custom_call.1} parent=1 // pred_check_branch
      %93 = sbr.rel (0) target = $region21
    $region20: #{tpu_custom_call.1} parent=1 // pred_region
      %s95 = ssub.s32 4096, 4096
      %96 = vsyncadd [#allocation11], %s95
      %s97 = sshll.u32 [#allocation12], 4
      %s98 = int_to_ptr.vmem [resolvable:$true] %s97
      %103 = dma.hbm_to_vmem [thread:$0]  %s5, 4096, %s98, [#allocation11], 128, 128, 8
    $region21: #{tpu_custom_call.1} parent=1 // pred_fallthru
      _
    // Predicated region
    $region22: #{tpu_custom_call.1} parent=1 // pred_check
      _
    $region23: #{tpu_custom_call.1} parent=1 // pred_check_branch
      %105 = sbr.rel (0) target = $region25
    $region24: #{tpu_custom_call.1} parent=1 // pred_region
      %106 = dma.done [#allocation5], 24576
    $region25: #{tpu_custom_call.1} parent=1 // pred_fallthru
      _
    // Predicated region
    $region26: #{tpu_custom_call.1} parent=1 // pred_check
      _
    $region27: #{tpu_custom_call.1} parent=1 // pred_check_branch
      %108 = sbr.rel (0) target = $region29
    $region28: #{tpu_custom_call.1} parent=1 // pred_region
      %109 = dma.done [#allocation8], 4096
    $region29: #{tpu_custom_call.1} parent=1 // pred_fallthru
      _
    // Predicated region
    $region30: #{tpu_custom_call.1} parent=1 // pred_check
      _
    $region31: #{tpu_custom_call.1} parent=1 // pred_check_branch
      %111 = sbr.rel (0) target = $region33
    $region32: #{tpu_custom_call.1} parent=1 // pred_region
      %112 = dma.done [#allocation8], 4096
    $region33: #{tpu_custom_call.1} parent=1 // pred_fallthru
      _
    // Predicated region
    $region34: #{tpu_custom_call.1} parent=1 // pred_check
      _
    $region35: #{tpu_custom_call.1} parent=1 // pred_check_branch
      %114 = sbr.rel (0) target = $region37
    $region36: #{tpu_custom_call.1} parent=1 // pred_region
      %115 = dma.done [#allocation11], 4096
    $region37: #{tpu_custom_call.1} parent=1 // pred_fallthru
      _
    // Predicated region
    $region38: #{tpu_custom_call.1} parent=1 // pred_check
      _
    $region39: #{tpu_custom_call.1} parent=1 // pred_check_branch
      %117 = sbr.rel (0) target = $region41
    $region40: #{tpu_custom_call.1} parent=1 // pred_region
      %118 = dma.done [#allocation11], 4096
    $region41: #{tpu_custom_call.1} parent=1 // pred_fallthru
      _
    %s119 = smul.u32 0, 2
    %v120 = vld [vmem:[#allocation4] sm:$0xff]
    %v121 = vld [vmem:[#allocation4 + $0x8] sm:$0xff]
    %v122 = vld [vmem:[#allocation4 + $0x10] sm:$0xff]
    %v123 = vld [vmem:[#allocation4 + $0x18] sm:$0xff]
    %v124 = vld [vmem:[#allocation4 + $0x20] sm:$0xff]
    %v125 = vld [vmem:[#allocation4 + $0x28] sm:$0xff]
    %v126 = vld [vmem:[#allocation4 + $0x30] sm:$0xff]
    %v127 = vld [vmem:[#allocation4 + $0x38] sm:$0xff]
    %v128 = vld [vmem:[#allocation4 + $0x40] sm:$0xff]
    %v129 = vld [vmem:[#allocation4 + $0x48] sm:$0xff]
    %v130 = vld [vmem:[#allocation4 + $0x50] sm:$0xff]
    %v131 = vld [vmem:[#allocation4 + $0x58] sm:$0xff]
    %v132 = vld [vmem:[#allocation4 + $0x60] sm:$0xff]
    %v133 = vld [vmem:[#allocation4 + $0x68] sm:$0xff]
    %v134 = vld [vmem:[#allocation4 + $0x70] sm:$0xff]
    %v135 = vld [vmem:[#allocation4 + $0x78] sm:$0xff]
    %v136 = vld [vmem:[#allocation4 + $0x80] sm:$0xff]
    %v137 = vld [vmem:[#allocation4 + $0x88] sm:$0xff]
    %v138 = vld [vmem:[#allocation4 + $0x90] sm:$0xff]
    %v139 = vld [vmem:[#allocation4 + $0x98] sm:$0xff]
    %v140 = vld [vmem:[#allocation4 + $0xa0] sm:$0xff]
    %v141 = vld [vmem:[#allocation4 + $0xa8] sm:$0xff]
    %v142 = vld [vmem:[#allocation4 + $0xb0] sm:$0xff]
    %v143 = vld [vmem:[#allocation4 + $0xb8] sm:$0xff]
    %v144 = vld [vmem:[#allocation4 + $0xc0] sm:$0xff]
    %v145 = vld [vmem:[#allocation4 + $0xc8] sm:$0xff]
    %v146 = vld [vmem:[#allocation4 + $0xd0] sm:$0xff]
    %v147 = vld [vmem:[#allocation4 + $0xd8] sm:$0xff]
    %v148 = vld [vmem:[#allocation4 + $0xe0] sm:$0xff]
    %v149 = vld [vmem:[#allocation4 + $0xe8] sm:$0xff]
    %v150 = vld [vmem:[#allocation4 + $0xf0] sm:$0xff]
    %v151 = vld [vmem:[#allocation4 + $0xf8] sm:$0xff]
    %v152 = vld [vmem:[#allocation4 + $0x100] sm:$0xff]
    %v153 = vld [vmem:[#allocation4 + $0x108] sm:$0xff]
    %v154 = vld [vmem:[#allocation4 + $0x110] sm:$0xff]
    %v155 = vld [vmem:[#allocation4 + $0x118] sm:$0xff]
    %v156 = vld [vmem:[#allocation4 + $0x120] sm:$0xff]
    %v157 = vld [vmem:[#allocation4 + $0x128] sm:$0xff]
    %v158 = vld [vmem:[#allocation4 + $0x130] sm:$0xff]
    %v159 = vld [vmem:[#allocation4 + $0x138] sm:$0xff]
    %v160 = vld [vmem:[#allocation4 + $0x140] sm:$0xff]
    %v161 = vld [vmem:[#allocation4 + $0x148] sm:$0xff]
    %v162 = vld [vmem:[#allocation4 + $0x150] sm:$0xff]
    %v163 = vld [vmem:[#allocation4 + $0x158] sm:$0xff]
    %v164 = vld [vmem:[#allocation4 + $0x160] sm:$0xff]
    %v165 = vld [vmem:[#allocation4 + $0x168] sm:$0xff]
    %v166 = vld [vmem:[#allocation4 + $0x170] sm:$0xff]
    %v167 = vld [vmem:[#allocation4 + $0x178] sm:$0xff]
    %v168 = vadd.f32 %v120, %v136
    %v169 = vadd.f32 %v168, %v152
    %v170 = vadd.f32 %v121, %v137
    %v171 = vadd.f32 %v170, %v153
    %v172 = vadd.f32 %v122, %v138
    %v173 = vadd.f32 %v172, %v154
    %v174 = vadd.f32 %v123, %v139
    %v175 = vadd.f32 %v174, %v155
    %v176 = vadd.f32 %v124, %v140
    %v177 = vadd.f32 %v176, %v156
    %v178 = vadd.f32 %v125, %v141
    %v179 = vadd.f32 %v178, %v157
    %v180 = vadd.f32 %v126, %v142
    %v181 = vadd.f32 %v180, %v158
    %v182 = vadd.f32 %v127, %v143
    %v183 = vadd.f32 %v182, %v159
    %v184 = vadd.f32 %v128, %v144
    %v185 = vadd.f32 %v184, %v160
    %v186 = vadd.f32 %v129, %v145
    %v187 = vadd.f32 %v186, %v161
    %v188 = vadd.f32 %v130, %v146
    %v189 = vadd.f32 %v188, %v162
    %v190 = vadd.f32 %v131, %v147
    %v191 = vadd.f32 %v190, %v163
    %v192 = vadd.f32 %v132, %v148
    %v193 = vadd.f32 %v192, %v164
    %v194 = vadd.f32 %v133, %v149
    %v195 = vadd.f32 %v194, %v165
    %v196 = vadd.f32 %v134, %v150
    %v197 = vadd.f32 %v196, %v166
    %v198 = vadd.f32 %v135, %v151
    %v199 = vadd.f32 %v198, %v167
    %v200 = vrcp.pop 3.0
    %v201 = vmul.f32 %v169, %v200
    %v202 = vmul.f32 %v171, %v200
    %v203 = vmul.f32 %v173, %v200
    %v204 = vmul.f32 %v175, %v200
    %v205 = vmul.f32 %v177, %v200
    %v206 = vmul.f32 %v179, %v200
    %v207 = vmul.f32 %v181, %v200
    %v208 = vmul.f32 %v183, %v200
    %v209 = vmul.f32 %v185, %v200
    %v210 = vmul.f32 %v187, %v200
    %v211 = vmul.f32 %v189, %v200
    %v212 = vmul.f32 %v191, %v200
    %v213 = vmul.f32 %v193, %v200
    %v214 = vmul.f32 %v195, %v200
    %v215 = vmul.f32 %v197, %v200
    %v216 = vmul.f32 %v199, %v200
    %s217 = scalar_lea.vmem [#allocation4], 384
    %v218 = vld [vmem:[%s217] sm:$0xff]
    %v219 = vld [vmem:[%s217 + $0x8] sm:$0xff]
    %v220 = vld [vmem:[%s217 + $0x10] sm:$0xff]
    %v221 = vld [vmem:[%s217 + $0x18] sm:$0xff]
    %v222 = vld [vmem:[%s217 + $0x20] sm:$0xff]
    %v223 = vld [vmem:[%s217 + $0x28] sm:$0xff]
    %v224 = vld [vmem:[%s217 + $0x30] sm:$0xff]
    %v225 = vld [vmem:[%s217 + $0x38] sm:$0xff]
    %v226 = vld [vmem:[%s217 + $0x40] sm:$0xff]
    %v227 = vld [vmem:[%s217 + $0x48] sm:$0xff]
    %v228 = vld [vmem:[%s217 + $0x50] sm:$0xff]
    %v229 = vld [vmem:[%s217 + $0x58] sm:$0xff]
    %v230 = vld [vmem:[%s217 + $0x60] sm:$0xff]
    %v231 = vld [vmem:[%s217 + $0x68] sm:$0xff]
    %v232 = vld [vmem:[%s217 + $0x70] sm:$0xff]
    %v233 = vld [vmem:[%s217 + $0x78] sm:$0xff]
    %v234 = vld [vmem:[%s217 + $0x80] sm:$0xff]
    %v235 = vld [vmem:[%s217 + $0x88] sm:$0xff]
    %v236 = vld [vmem:[%s217 + $0x90] sm:$0xff]
    %v237 = vld [vmem:[%s217 + $0x98] sm:$0xff]
    %v238 = vld [vmem:[%s217 + $0xa0] sm:$0xff]
    %v239 = vld [vmem:[%s217 + $0xa8] sm:$0xff]
    %v240 = vld [vmem:[%s217 + $0xb0] sm:$0xff]
    %v241 = vld [vmem:[%s217 + $0xb8] sm:$0xff]
    %v242 = vld [vmem:[%s217 + $0xc0] sm:$0xff]
    %v243 = vld [vmem:[%s217 + $0xc8] sm:$0xff]
    %v244 = vld [vmem:[%s217 + $0xd0] sm:$0xff]
    %v245 = vld [vmem:[%s217 + $0xd8] sm:$0xff]
    %v246 = vld [vmem:[%s217 + $0xe0] sm:$0xff]
    %v247 = vld [vmem:[%s217 + $0xe8] sm:$0xff]
    %v248 = vld [vmem:[%s217 + $0xf0] sm:$0xff]
    %v249 = vld [vmem:[%s217 + $0xf8] sm:$0xff]
    %v250 = vld [vmem:[%s217 + $0x100] sm:$0xff]
    %v251 = vld [vmem:[%s217 + $0x108] sm:$0xff]
    %v252 = vld [vmem:[%s217 + $0x110] sm:$0xff]
    %v253 = vld [vmem:[%s217 + $0x118] sm:$0xff]
    %v254 = vld [vmem:[%s217 + $0x120] sm:$0xff]
    %v255 = vld [vmem:[%s217 + $0x128] sm:$0xff]
    %v256 = vld [vmem:[%s217 + $0x130] sm:$0xff]
    %v257 = vld [vmem:[%s217 + $0x138] sm:$0xff]
    %v258 = vld [vmem:[%s217 + $0x140] sm:$0xff]
    %v259 = vld [vmem:[%s217 + $0x148] sm:$0xff]
    %v260 = vld [vmem:[%s217 + $0x150] sm:$0xff]
    %v261 = vld [vmem:[%s217 + $0x158] sm:$0xff]
    %v262 = vld [vmem:[%s217 + $0x160] sm:$0xff]
    %v263 = vld [vmem:[%s217 + $0x168] sm:$0xff]
    %v264 = vld [vmem:[%s217 + $0x170] sm:$0xff]
    %v265 = vld [vmem:[%s217 + $0x178] sm:$0xff]
    %v266 = vadd.f32 %v218, %v234
    %v267 = vadd.f32 %v266, %v250
    %v268 = vadd.f32 %v219, %v235
    %v269 = vadd.f32 %v268, %v251
    %v270 = vadd.f32 %v220, %v236
    %v271 = vadd.f32 %v270, %v252
    %v272 = vadd.f32 %v221, %v237
    %v273 = vadd.f32 %v272, %v253
    %v274 = vadd.f32 %v222, %v238
    %v275 = vadd.f32 %v274, %v254
    %v276 = vadd.f32 %v223, %v239
    %v277 = vadd.f32 %v276, %v255
    %v278 = vadd.f32 %v224, %v240
    %v279 = vadd.f32 %v278, %v256
    %v280 = vadd.f32 %v225, %v241
    %v281 = vadd.f32 %v280, %v257
    %v282 = vadd.f32 %v226, %v242
    %v283 = vadd.f32 %v282, %v258
    %v284 = vadd.f32 %v227, %v243
    %v285 = vadd.f32 %v284, %v259
    %v286 = vadd.f32 %v228, %v244
    %v287 = vadd.f32 %v286, %v260
    %v288 = vadd.f32 %v229, %v245
    %v289 = vadd.f32 %v288, %v261
    %v290 = vadd.f32 %v230, %v246
    %v291 = vadd.f32 %v290, %v262
    %v292 = vadd.f32 %v231, %v247
    %v293 = vadd.f32 %v292, %v263
    %v294 = vadd.f32 %v232, %v248
    %v295 = vadd.f32 %v294, %v264
    %v296 = vadd.f32 %v233, %v249
    %v297 = vadd.f32 %v296, %v265
    %v298 = vmul.f32 %v267, %v200
    %v299 = vmul.f32 %v269, %v200
    %v300 = vmul.f32 %v271, %v200
    %v301 = vmul.f32 %v273, %v200
    %v302 = vmul.f32 %v275, %v200
    %v303 = vmul.f32 %v277, %v200
    %v304 = vmul.f32 %v279, %v200
    %v305 = vmul.f32 %v281, %v200
    %v306 = vmul.f32 %v283, %v200
    %v307 = vmul.f32 %v285, %v200
    %v308 = vmul.f32 %v287, %v200
    %v309 = vmul.f32 %v289, %v200
    %v310 = vmul.f32 %v291, %v200
    %v311 = vmul.f32 %v293, %v200
    %v312 = vmul.f32 %v295, %v200
    %v313 = vmul.f32 %v297, %v200
    %v314 = vld [vmem:[#allocation7] sm:$0xff]
    %v315 = vld [vmem:[#allocation7 + $0x8] sm:$0xff]
    %v316 = vld [vmem:[#allocation7 + $0x10] sm:$0xff]
    %v317 = vld [vmem:[#allocation7 + $0x18] sm:$0xff]
    %v318 = vld [vmem:[#allocation7 + $0x20] sm:$0xff]
    %v319 = vld [vmem:[#allocation7 + $0x28] sm:$0xff]
    %v320 = vld [vmem:[#allocation7 + $0x30] sm:$0xff]
    %v321 = vld [vmem:[#allocation7 + $0x38] sm:$0xff]
    %v322 = vld [vmem:[#allocation7 + $0x40] sm:$0xff]
    %v323 = vld [vmem:[#allocation7 + $0x48] sm:$0xff]
    %v324 = vld [vmem:[#allocation7 + $0x50] sm:$0xff]
    %v325 = vld [vmem:[#allocation7 + $0x58] sm:$0xff]
    %v326 = vld [vmem:[#allocation7 + $0x60] sm:$0xff]
    %v327 = vld [vmem:[#allocation7 + $0x68] sm:$0xff]
    %v328 = vld [vmem:[#allocation7 + $0x70] sm:$0xff]
    %v329 = vld [vmem:[#allocation7 + $0x78] sm:$0xff]
    %v330 = vsub.f32 %v314, %v201
    %v331 = vsub.f32 %v315, %v202
    %v332 = vsub.f32 %v316, %v203
    %v333 = vsub.f32 %v317, %v204
    %v334 = vsub.f32 %v318, %v205
    %v335 = vsub.f32 %v319, %v206
    %v336 = vsub.f32 %v320, %v207
    %v337 = vsub.f32 %v321, %v208
    %v338 = vsub.f32 %v322, %v209
    %v339 = vsub.f32 %v323, %v210
    %v340 = vsub.f32 %v324, %v211
    %v341 = vsub.f32 %v325, %v212
    %v342 = vsub.f32 %v326, %v213
    %v343 = vsub.f32 %v327, %v214
    %v344 = vsub.f32 %v328, %v215
    %v345 = vsub.f32 %v329, %v216
    %v346 = vand.u32 2147483647, %v330
    %v347 = vand.u32 2147483647, %v331
    %v348 = vand.u32 2147483647, %v332
    %v349 = vand.u32 2147483647, %v333
    %v350 = vand.u32 2147483647, %v334
    %v351 = vand.u32 2147483647, %v335
    %v352 = vand.u32 2147483647, %v336
    %v353 = vand.u32 2147483647, %v337
    %v354 = vand.u32 2147483647, %v338
    %v355 = vand.u32 2147483647, %v339
    %v356 = vand.u32 2147483647, %v340
    %v357 = vand.u32 2147483647, %v341
    %v358 = vand.u32 2147483647, %v342
    %v359 = vand.u32 2147483647, %v343
    %v360 = vand.u32 2147483647, %v344
    %v361 = vand.u32 2147483647, %v345
    %v362 = vld [vmem:[#allocation9] sm:$0xff]
    %v363 = vld [vmem:[#allocation9 + $0x8] sm:$0xff]
    %v364 = vld [vmem:[#allocation9 + $0x10] sm:$0xff]
    %v365 = vld [vmem:[#allocation9 + $0x18] sm:$0xff]
    %v366 = vld [vmem:[#allocation9 + $0x20] sm:$0xff]
    %v367 = vld [vmem:[#allocation9 + $0x28] sm:$0xff]
    %v368 = vld [vmem:[#allocation9 + $0x30] sm:$0xff]
    %v369 = vld [vmem:[#allocation9 + $0x38] sm:$0xff]
    %v370 = vld [vmem:[#allocation9 + $0x40] sm:$0xff]
    %v371 = vld [vmem:[#allocation9 + $0x48] sm:$0xff]
    %v372 = vld [vmem:[#allocation9 + $0x50] sm:$0xff]
    %v373 = vld [vmem:[#allocation9 + $0x58] sm:$0xff]
    %v374 = vld [vmem:[#allocation9 + $0x60] sm:$0xff]
    %v375 = vld [vmem:[#allocation9 + $0x68] sm:$0xff]
    %v376 = vld [vmem:[#allocation9 + $0x70] sm:$0xff]
    %v377 = vld [vmem:[#allocation9 + $0x78] sm:$0xff]
    %s378 = sld [smem:[#allocation3 + %s119]]
    %v379 = vstv %s378
    %v380 = vmul.f32 %v362, %v379
    %v381 = vmul.f32 %v363, %v379
    %v382 = vmul.f32 %v364, %v379
    %v383 = vmul.f32 %v365, %v379
    %v384 = vmul.f32 %v366, %v379
    %v385 = vmul.f32 %v367, %v379
    %v386 = vmul.f32 %v368, %v379
    %v387 = vmul.f32 %v369, %v379
    %v388 = vmul.f32 %v370, %v379
    %v389 = vmul.f32 %v371, %v379
    %v390 = vmul.f32 %v372, %v379
    %v391 = vmul.f32 %v373, %v379
    %v392 = vmul.f32 %v374, %v379
    %v393 = vmul.f32 %v375, %v379
    %v394 = vmul.f32 %v376, %v379
    %v395 = vmul.f32 %v377, %v379
    %v396 = vmul.f32 %v298, %v380
    %v397 = vmul.f32 %v299, %v381
    %v398 = vmul.f32 %v300, %v382
    %v399 = vmul.f32 %v301, %v383
    %v400 = vmul.f32 %v302, %v384
    %v401 = vmul.f32 %v303, %v385
    %v402 = vmul.f32 %v304, %v386
    %v403 = vmul.f32 %v305, %v387
    %v404 = vmul.f32 %v306, %v388
    %v405 = vmul.f32 %v307, %v389
    %v406 = vmul.f32 %v308, %v390
    %v407 = vmul.f32 %v309, %v391
    %v408 = vmul.f32 %v310, %v392
    %v409 = vmul.f32 %v311, %v393
    %v410 = vmul.f32 %v312, %v394
    %v411 = vmul.f32 %v313, %v395
    %v412 = vadd.f32 %v346, %v347
    %v413 = vadd.f32 %v412, %v348
    %v414 = vadd.f32 %v413, %v349
    %v415 = vadd.f32 %v414, %v350
    %v416 = vadd.f32 %v415, %v351
    %v417 = vadd.f32 %v416, %v352
    %v418 = vadd.f32 %v417, %v353
    %v419 = vadd.f32 %v418, %v354
    %v420 = vadd.f32 %v419, %v355
    %v421 = vadd.f32 %v420, %v356
    %v422 = vadd.f32 %v421, %v357
    %v423 = vadd.f32 %v422, %v358
    %v424 = vadd.f32 %v423, %v359
    %v425 = vadd.f32 %v424, %v360
    %v426 = vadd.f32 %v425, %v361
    %427 = vadd.xlane.f32.xlu0 %v426
    %v428 = vpop.xlane.xlu0 %427
    %v429 = vrot.slane %v428, 4
    %v430 = vadd.f32 %v428, %v429
    %v431 = vrot.slane %v430, 2
    %v432 = vadd.f32 %v430, %v431
    %v433 = vrot.slane %v432, 1
    %v434 = vadd.f32 %v432, %v433
    %s435 = vtos %v434
    %s436 = smul.f32 %s435, 6.1035156e-05
    %s437 = scalar_lea.smem [#allocation13], 0
    %438 = sst [smem:[%s437]] %s436
    %v439 = vadd.f32 %v396, %v397
    %v440 = vadd.f32 %v439, %v398
    %v441 = vadd.f32 %v440, %v399
    %v442 = vadd.f32 %v441, %v400
    %v443 = vadd.f32 %v442, %v401
    %v444 = vadd.f32 %v443, %v402
    %v445 = vadd.f32 %v444, %v403
    %v446 = vadd.f32 %v445, %v404
    %v447 = vadd.f32 %v446, %v405
    %v448 = vadd.f32 %v447, %v406
    %v449 = vadd.f32 %v448, %v407
    %v450 = vadd.f32 %v449, %v408
    %v451 = vadd.f32 %v450, %v409
    %v452 = vadd.f32 %v451, %v410
    %v453 = vadd.f32 %v452, %v411
    %454 = vadd.xlane.f32.xlu0 %v453
    %v455 = vpop.xlane.xlu0 %454
    %v456 = vrot.slane %v455, 4
    %v457 = vadd.f32 %v455, %v456
    %v458 = vrot.slane %v457, 2
    %v459 = vadd.f32 %v457, %v458
    %v460 = vrot.slane %v459, 1
    %v461 = vadd.f32 %v459, %v460
    %s462 = vtos %v461
    %s463 = smul.f32 %s462, 6.1035156e-05
    %s464 = scalar_lea.smem [#allocation13], 1
    %465 = sst [smem:[%s464]] %s463
    %v466 = vld [vmem:[#allocation10] sm:$0xff]
    %v467 = vld [vmem:[#allocation10 + $0x8] sm:$0xff]
    %v468 = vld [vmem:[#allocation10 + $0x10] sm:$0xff]
    %v469 = vld [vmem:[#allocation10 + $0x18] sm:$0xff]
    %v470 = vld [vmem:[#allocation10 + $0x20] sm:$0xff]
    %v471 = vld [vmem:[#allocation10 + $0x28] sm:$0xff]
    %v472 = vld [vmem:[#allocation10 + $0x30] sm:$0xff]
    %v473 = vld [vmem:[#allocation10 + $0x38] sm:$0xff]
    %v474 = vld [vmem:[#allocation10 + $0x40] sm:$0xff]
    %v475 = vld [vmem:[#allocation10 + $0x48] sm:$0xff]
    %v476 = vld [vmem:[#allocation10 + $0x50] sm:$0xff]
    %v477 = vld [vmem:[#allocation10 + $0x58] sm:$0xff]
    %v478 = vld [vmem:[#allocation10 + $0x60] sm:$0xff]
    %v479 = vld [vmem:[#allocation10 + $0x68] sm:$0xff]
    %v480 = vld [vmem:[#allocation10 + $0x70] sm:$0xff]
    %v481 = vld [vmem:[#allocation10 + $0x78] sm:$0xff]
    %v482 = vmul.f32 %v466, -0.25
    %v483 = vmul.f32 %v467, -0.25
    %v484 = vmul.f32 %v468, -0.25
    %v485 = vmul.f32 %v469, -0.25
    %v486 = vmul.f32 %v470, -0.25
    %v487 = vmul.f32 %v471, -0.25
    %v488 = vmul.f32 %v472, -0.25
    %v489 = vmul.f32 %v473, -0.25
    %v490 = vmul.f32 %v474, -0.25
    %v491 = vmul.f32 %v475, -0.25
    %v492 = vmul.f32 %v476, -0.25
    %v493 = vmul.f32 %v477, -0.25
    %v494 = vmul.f32 %v478, -0.25
    %v495 = vmul.f32 %v479, -0.25
    %v496 = vmul.f32 %v480, -0.25
    %v497 = vmul.f32 %v481, -0.25
    %v498 = vtanh.pop %v482
    %v499 = vtanh.pop %v483
    %v500 = vtanh.pop %v484
    %v501 = vtanh.pop %v485
    %v502 = vtanh.pop %v486
    %v503 = vtanh.pop %v487
    %v504 = vtanh.pop %v488
    %v505 = vtanh.pop %v489
    %v506 = vtanh.pop %v490
    %v507 = vtanh.pop %v491
    %v508 = vtanh.pop %v492
    %v509 = vtanh.pop %v493
    %v510 = vtanh.pop %v494
    %v511 = vtanh.pop %v495
    %v512 = vtanh.pop %v496
    %v513 = vtanh.pop %v497
    %v514 = vadd.f32 %v498, 1.0
    %v515 = vadd.f32 %v499, 1.0
    %v516 = vadd.f32 %v500, 1.0
    %v517 = vadd.f32 %v501, 1.0
    %v518 = vadd.f32 %v502, 1.0
    %v519 = vadd.f32 %v503, 1.0
    %v520 = vadd.f32 %v504, 1.0
    %v521 = vadd.f32 %v505, 1.0
    %v522 = vadd.f32 %v506, 1.0
    %v523 = vadd.f32 %v507, 1.0
    %v524 = vadd.f32 %v508, 1.0
    %v525 = vadd.f32 %v509, 1.0
    %v526 = vadd.f32 %v510, 1.0
    %v527 = vadd.f32 %v511, 1.0
    %v528 = vadd.f32 %v512, 1.0
    %v529 = vadd.f32 %v513, 1.0
    %v530 = vmul.f32 %v514, 0.5
    %v531 = vmul.f32 %v515, 0.5
    %v532 = vmul.f32 %v516, 0.5
    %v533 = vmul.f32 %v517, 0.5
    %v534 = vmul.f32 %v518, 0.5
    %v535 = vmul.f32 %v519, 0.5
    %v536 = vmul.f32 %v520, 0.5
    %v537 = vmul.f32 %v521, 0.5
    %v538 = vmul.f32 %v522, 0.5
    %v539 = vmul.f32 %v523, 0.5
    %v540 = vmul.f32 %v524, 0.5
    %v541 = vmul.f32 %v525, 0.5
    %v542 = vmul.f32 %v526, 0.5
    %v543 = vmul.f32 %v527, 0.5
    %v544 = vmul.f32 %v528, 0.5
    %v545 = vmul.f32 %v529, 0.5
    %v546 = vmul.f32 %v346, %v530
    %v547 = vmul.f32 %v347, %v531
    %v548 = vmul.f32 %v348, %v532
    %v549 = vmul.f32 %v349, %v533
    %v550 = vmul.f32 %v350, %v534
    %v551 = vmul.f32 %v351, %v535
    %v552 = vmul.f32 %v352, %v536
    %v553 = vmul.f32 %v353, %v537
    %v554 = vmul.f32 %v354, %v538
    %v555 = vmul.f32 %v355, %v539
    %v556 = vmul.f32 %v356, %v540
    %v557 = vmul.f32 %v357, %v541
    %v558 = vmul.f32 %v358, %v542
    %v559 = vmul.f32 %v359, %v543
    %v560 = vmul.f32 %v360, %v544
    %v561 = vmul.f32 %v361, %v545
    %v562 = vlog2.pop %v530
    %v563 = vmul.f32 %v562, 0.6931472
    %v564 = vlog2.pop %v531
    %v565 = vmul.f32 %v564, 0.6931472
    %v566 = vlog2.pop %v532
    %v567 = vmul.f32 %v566, 0.6931472
    %v568 = vlog2.pop %v533
    %v569 = vmul.f32 %v568, 0.6931472
    %v570 = vlog2.pop %v534
    %v571 = vmul.f32 %v570, 0.6931472
    %v572 = vlog2.pop %v535
    %v573 = vmul.f32 %v572, 0.6931472
    %v574 = vlog2.pop %v536
    %v575 = vmul.f32 %v574, 0.6931472
    %v576 = vlog2.pop %v537
    %v577 = vmul.f32 %v576, 0.6931472
    %v578 = vlog2.pop %v538
    %v579 = vmul.f32 %v578, 0.6931472
    %v580 = vlog2.pop %v539
    %v581 = vmul.f32 %v580, 0.6931472
    %v582 = vlog2.pop %v540
    %v583 = vmul.f32 %v582, 0.6931472
    %v584 = vlog2.pop %v541
    %v585 = vmul.f32 %v584, 0.6931472
    %v586 = vlog2.pop %v542
    %v587 = vmul.f32 %v586, 0.6931472
    %v588 = vlog2.pop %v543
    %v589 = vmul.f32 %v588, 0.6931472
    %v590 = vlog2.pop %v544
    %v591 = vmul.f32 %v590, 0.6931472
    %v592 = vlog2.pop %v545
    %v593 = vmul.f32 %v592, 0.6931472
    %v594 = vsub.f32 %v546, %v563
    %v595 = vsub.f32 %v547, %v565
    %v596 = vsub.f32 %v548, %v567
    %v597 = vsub.f32 %v549, %v569
    %v598 = vsub.f32 %v550, %v571
    %v599 = vsub.f32 %v551, %v573
    %v600 = vsub.f32 %v552, %v575
    %v601 = vsub.f32 %v553, %v577
    %v602 = vsub.f32 %v554, %v579
    %v603 = vsub.f32 %v555, %v581
    %v604 = vsub.f32 %v556, %v583
    %v605 = vsub.f32 %v557, %v585
    %v606 = vsub.f32 %v558, %v587
    %v607 = vsub.f32 %v559, %v589
    %v608 = vsub.f32 %v560, %v591
    %v609 = vsub.f32 %v561, %v593
    %v610 = vadd.f32 %v594, %v595
    %v611 = vadd.f32 %v610, %v596
    %v612 = vadd.f32 %v611, %v597
    %v613 = vadd.f32 %v612, %v598
    %v614 = vadd.f32 %v613, %v599
    %v615 = vadd.f32 %v614, %v600
    %v616 = vadd.f32 %v615, %v601
    %v617 = vadd.f32 %v616, %v602
    %v618 = vadd.f32 %v617, %v603
    %v619 = vadd.f32 %v618, %v604
    %v620 = vadd.f32 %v619, %v605
    %v621 = vadd.f32 %v620, %v606
    %v622 = vadd.f32 %v621, %v607
    %v623 = vadd.f32 %v622, %v608
    %v624 = vadd.f32 %v623, %v609
    %625 = vadd.xlane.f32.xlu0 %v624
    %v626 = vpop.xlane.xlu0 %625
    %v627 = vrot.slane %v626, 4
    %v628 = vadd.f32 %v626, %v627
    %v629 = vrot.slane %v628, 2
    %v630 = vadd.f32 %v628, %v629
    %v631 = vrot.slane %v630, 1
    %v632 = vadd.f32 %v630, %v631
    %s633 = vtos %v632
    %s634 = smul.f32 %s633, 6.1035156e-05
    %s635 = scalar_lea.smem [#allocation13], 2
    %636 = sst [smem:[%s635]] %s634
    %v637 = vld [vmem:[#allocation12] sm:$0xff]
    %v638 = vld [vmem:[#allocation12 + $0x8] sm:$0xff]
    %v639 = vld [vmem:[#allocation12 + $0x10] sm:$0xff]
    %v640 = vld [vmem:[#allocation12 + $0x18] sm:$0xff]
    %v641 = vld [vmem:[#allocation12 + $0x20] sm:$0xff]
    %v642 = vld [vmem:[#allocation12 + $0x28] sm:$0xff]
    %v643 = vld [vmem:[#allocation12 + $0x30] sm:$0xff]
    %v644 = vld [vmem:[#allocation12 + $0x38] sm:$0xff]
    %v645 = vld [vmem:[#allocation12 + $0x40] sm:$0xff]
    %v646 = vld [vmem:[#allocation12 + $0x48] sm:$0xff]
    %v647 = vld [vmem:[#allocation12 + $0x50] sm:$0xff]
    %v648 = vld [vmem:[#allocation12 + $0x58] sm:$0xff]
    %v649 = vld [vmem:[#allocation12 + $0x60] sm:$0xff]
    %v650 = vld [vmem:[#allocation12 + $0x68] sm:$0xff]
    %v651 = vld [vmem:[#allocation12 + $0x70] sm:$0xff]
    %v652 = vld [vmem:[#allocation12 + $0x78] sm:$0xff]
    %v653 = vmul.f32 %v637, -0.25
    %v654 = vmul.f32 %v638, -0.25
    %v655 = vmul.f32 %v639, -0.25
    %v656 = vmul.f32 %v640, -0.25
    %v657 = vmul.f32 %v641, -0.25
    %v658 = vmul.f32 %v642, -0.25
    %v659 = vmul.f32 %v643, -0.25
    %v660 = vmul.f32 %v644, -0.25
    %v661 = vmul.f32 %v645, -0.25
    %v662 = vmul.f32 %v646, -0.25
    %v663 = vmul.f32 %v647, -0.25
    %v664 = vmul.f32 %v648, -0.25
    %v665 = vmul.f32 %v649, -0.25
    %v666 = vmul.f32 %v650, -0.25
    %v667 = vmul.f32 %v651, -0.25
    %v668 = vmul.f32 %v652, -0.25
    %v669 = vtanh.pop %v653
    %v670 = vtanh.pop %v654
    %v671 = vtanh.pop %v655
    %v672 = vtanh.pop %v656
    %v673 = vtanh.pop %v657
    %v674 = vtanh.pop %v658
    %v675 = vtanh.pop %v659
    %v676 = vtanh.pop %v660
    %v677 = vtanh.pop %v661
    %v678 = vtanh.pop %v662
    %v679 = vtanh.pop %v663
    %v680 = vtanh.pop %v664
    %v681 = vtanh.pop %v665
    %v682 = vtanh.pop %v666
    %v683 = vtanh.pop %v667
    %v684 = vtanh.pop %v668
    %v685 = vadd.f32 %v669, 1.0
    %v686 = vadd.f32 %v670, 1.0
    %v687 = vadd.f32 %v671, 1.0
    %v688 = vadd.f32 %v672, 1.0
    %v689 = vadd.f32 %v673, 1.0
    %v690 = vadd.f32 %v674, 1.0
    %v691 = vadd.f32 %v675, 1.0
    %v692 = vadd.f32 %v676, 1.0
    %v693 = vadd.f32 %v677, 1.0
    %v694 = vadd.f32 %v678, 1.0
    %v695 = vadd.f32 %v679, 1.0
    %v696 = vadd.f32 %v680, 1.0
    %v697 = vadd.f32 %v681, 1.0
    %v698 = vadd.f32 %v682, 1.0
    %v699 = vadd.f32 %v683, 1.0
    %v700 = vadd.f32 %v684, 1.0
    %v701 = vmul.f32 %v685, 0.5
    %v702 = vmul.f32 %v686, 0.5
    %v703 = vmul.f32 %v687, 0.5
    %v704 = vmul.f32 %v688, 0.5
    %v705 = vmul.f32 %v689, 0.5
    %v706 = vmul.f32 %v690, 0.5
    %v707 = vmul.f32 %v691, 0.5
    %v708 = vmul.f32 %v692, 0.5
    %v709 = vmul.f32 %v693, 0.5
    %v710 = vmul.f32 %v694, 0.5
    %v711 = vmul.f32 %v695, 0.5
    %v712 = vmul.f32 %v696, 0.5
    %v713 = vmul.f32 %v697, 0.5
    %v714 = vmul.f32 %v698, 0.5
    %v715 = vmul.f32 %v699, 0.5
    %v716 = vmul.f32 %v700, 0.5
    %v717 = vmul.f32 %v396, %v701
    %v718 = vmul.f32 %v397, %v702
    %v719 = vmul.f32 %v398, %v703
    %v720 = vmul.f32 %v399, %v704
    %v721 = vmul.f32 %v400, %v705
    %v722 = vmul.f32 %v401, %v706
    %v723 = vmul.f32 %v402, %v707
    %v724 = vmul.f32 %v403, %v708
    %v725 = vmul.f32 %v404, %v709
    %v726 = vmul.f32 %v405, %v710
    %v727 = vmul.f32 %v406, %v711
    %v728 = vmul.f32 %v407, %v712
    %v729 = vmul.f32 %v408, %v713
    %v730 = vmul.f32 %v409, %v714
    %v731 = vmul.f32 %v410, %v715
    %v732 = vmul.f32 %v411, %v716
    %v733 = vlog2.pop %v701
    %v734 = vmul.f32 %v733, 0.6931472
    %v735 = vlog2.pop %v702
    %v736 = vmul.f32 %v735, 0.6931472
    %v737 = vlog2.pop %v703
    %v738 = vmul.f32 %v737, 0.6931472
    %v739 = vlog2.pop %v704
    %v740 = vmul.f32 %v739, 0.6931472
    %v741 = vlog2.pop %v705
    %v742 = vmul.f32 %v741, 0.6931472
    %v743 = vlog2.pop %v706
    %v744 = vmul.f32 %v743, 0.6931472
    %v745 = vlog2.pop %v707
    %v746 = vmul.f32 %v745, 0.6931472
    %v747 = vlog2.pop %v708
    %v748 = vmul.f32 %v747, 0.6931472
    %v749 = vlog2.pop %v709
    %v750 = vmul.f32 %v749, 0.6931472
    %v751 = vlog2.pop %v710
    %v752 = vmul.f32 %v751, 0.6931472
    %v753 = vlog2.pop %v711
    %v754 = vmul.f32 %v753, 0.6931472
    %v755 = vlog2.pop %v712
    %v756 = vmul.f32 %v755, 0.6931472
    %v757 = vlog2.pop %v713
    %v758 = vmul.f32 %v757, 0.6931472
    %v759 = vlog2.pop %v714
    %v760 = vmul.f32 %v759, 0.6931472
    %v761 = vlog2.pop %v715
    %v762 = vmul.f32 %v761, 0.6931472
    %v763 = vlog2.pop %v716
    %v764 = vmul.f32 %v763, 0.6931472
    %v765 = vsub.f32 %v717, %v734
    %v766 = vsub.f32 %v718, %v736
    %v767 = vsub.f32 %v719, %v738
    %v768 = vsub.f32 %v720, %v740
    %v769 = vsub.f32 %v721, %v742
    %v770 = vsub.f32 %v722, %v744
    %v771 = vsub.f32 %v723, %v746
    %v772 = vsub.f32 %v724, %v748
    %v773 = vsub.f32 %v725, %v750
    %v774 = vsub.f32 %v726, %v752
    %v775 = vsub.f32 %v727, %v754
    %v776 = vsub.f32 %v728, %v756
    %v777 = vsub.f32 %v729, %v758
    %v778 = vsub.f32 %v730, %v760
    %v779 = vsub.f32 %v731, %v762
    %v780 = vsub.f32 %v732, %v764
    %v781 = vadd.f32 %v765, %v766
    %v782 = vadd.f32 %v781, %v767
    %v783 = vadd.f32 %v782, %v768
    %v784 = vadd.f32 %v783, %v769
    %v785 = vadd.f32 %v784, %v770
    %v786 = vadd.f32 %v785, %v771
    %v787 = vadd.f32 %v786, %v772
    %v788 = vadd.f32 %v787, %v773
    %v789 = vadd.f32 %v788, %v774
    %v790 = vadd.f32 %v789, %v775
    %v791 = vadd.f32 %v790, %v776
    %v792 = vadd.f32 %v791, %v777
    %v793 = vadd.f32 %v792, %v778
    %v794 = vadd.f32 %v793, %v779
    %v795 = vadd.f32 %v794, %v780
    %796 = vadd.xlane.f32.xlu0 %v795
    %v797 = vpop.xlane.xlu0 %796
    %v798 = vrot.slane %v797, 4
    %v799 = vadd.f32 %v797, %v798
    %v800 = vrot.slane %v799, 2
    %v801 = vadd.f32 %v799, %v800
    %v802 = vrot.slane %v801, 1
    %v803 = vadd.f32 %v801, %v802
    %s804 = vtos %v803
    %s805 = smul.f32 %s804, 6.1035156e-05
    %s806 = scalar_lea.smem [#allocation13], 3
    %807 = sst [smem:[%s806]] %s805
    %s808 = scalar_lea.vmem [#allocation4], 768
    %v809 = vld [vmem:[%s808] sm:$0xff]
    %v810 = vld [vmem:[%s808 + $0x8] sm:$0xff]
    %v811 = vld [vmem:[%s808 + $0x10] sm:$0xff]
    %v812 = vld [vmem:[%s808 + $0x18] sm:$0xff]
    %v813 = vld [vmem:[%s808 + $0x20] sm:$0xff]
    %v814 = vld [vmem:[%s808 + $0x28] sm:$0xff]
    %v815 = vld [vmem:[%s808 + $0x30] sm:$0xff]
    %v816 = vld [vmem:[%s808 + $0x38] sm:$0xff]
    %v817 = vld [vmem:[%s808 + $0x40] sm:$0xff]
    %v818 = vld [vmem:[%s808 + $0x48] sm:$0xff]
    %v819 = vld [vmem:[%s808 + $0x50] sm:$0xff]
    %v820 = vld [vmem:[%s808 + $0x58] sm:$0xff]
    %v821 = vld [vmem:[%s808 + $0x60] sm:$0xff]
    %v822 = vld [vmem:[%s808 + $0x68] sm:$0xff]
    %v823 = vld [vmem:[%s808 + $0x70] sm:$0xff]
    %v824 = vld [vmem:[%s808 + $0x78] sm:$0xff]
    %v825 = vld [vmem:[%s808 + $0x80] sm:$0xff]
    %v826 = vld [vmem:[%s808 + $0x88] sm:$0xff]
    %v827 = vld [vmem:[%s808 + $0x90] sm:$0xff]
    %v828 = vld [vmem:[%s808 + $0x98] sm:$0xff]
    %v829 = vld [vmem:[%s808 + $0xa0] sm:$0xff]
    %v830 = vld [vmem:[%s808 + $0xa8] sm:$0xff]
    %v831 = vld [vmem:[%s808 + $0xb0] sm:$0xff]
    %v832 = vld [vmem:[%s808 + $0xb8] sm:$0xff]
    %v833 = vld [vmem:[%s808 + $0xc0] sm:$0xff]
    %v834 = vld [vmem:[%s808 + $0xc8] sm:$0xff]
    %v835 = vld [vmem:[%s808 + $0xd0] sm:$0xff]
    %v836 = vld [vmem:[%s808 + $0xd8] sm:$0xff]
    %v837 = vld [vmem:[%s808 + $0xe0] sm:$0xff]
    %v838 = vld [vmem:[%s808 + $0xe8] sm:$0xff]
    %v839 = vld [vmem:[%s808 + $0xf0] sm:$0xff]
    %v840 = vld [vmem:[%s808 + $0xf8] sm:$0xff]
    %v841 = vld [vmem:[%s808 + $0x100] sm:$0xff]
    %v842 = vld [vmem:[%s808 + $0x108] sm:$0xff]
    %v843 = vld [vmem:[%s808 + $0x110] sm:$0xff]
    %v844 = vld [vmem:[%s808 + $0x118] sm:$0xff]
    %v845 = vld [vmem:[%s808 + $0x120] sm:$0xff]
    %v846 = vld [vmem:[%s808 + $0x128] sm:$0xff]
    %v847 = vld [vmem:[%s808 + $0x130] sm:$0xff]
    %v848 = vld [vmem:[%s808 + $0x138] sm:$0xff]
    %v849 = vld [vmem:[%s808 + $0x140] sm:$0xff]
    %v850 = vld [vmem:[%s808 + $0x148] sm:$0xff]
    %v851 = vld [vmem:[%s808 + $0x150] sm:$0xff]
    %v852 = vld [vmem:[%s808 + $0x158] sm:$0xff]
    %v853 = vld [vmem:[%s808 + $0x160] sm:$0xff]
    %v854 = vld [vmem:[%s808 + $0x168] sm:$0xff]
    %v855 = vld [vmem:[%s808 + $0x170] sm:$0xff]
    %v856 = vld [vmem:[%s808 + $0x178] sm:$0xff]
    %v857 = vadd.f32 %v809, %v825
    %v858 = vadd.f32 %v857, %v841
    %v859 = vadd.f32 %v810, %v826
    %v860 = vadd.f32 %v859, %v842
    %v861 = vadd.f32 %v811, %v827
    %v862 = vadd.f32 %v861, %v843
    %v863 = vadd.f32 %v812, %v828
    %v864 = vadd.f32 %v863, %v844
    %v865 = vadd.f32 %v813, %v829
    %v866 = vadd.f32 %v865, %v845
    %v867 = vadd.f32 %v814, %v830
    %v868 = vadd.f32 %v867, %v846
    %v869 = vadd.f32 %v815, %v831
    %v870 = vadd.f32 %v869, %v847
    %v871 = vadd.f32 %v816, %v832
    %v872 = vadd.f32 %v871, %v848
    %v873 = vadd.f32 %v817, %v833
    %v874 = vadd.f32 %v873, %v849
    %v875 = vadd.f32 %v818, %v834
    %v876 = vadd.f32 %v875, %v850
    %v877 = vadd.f32 %v819, %v835
    %v878 = vadd.f32 %v877, %v851
    %v879 = vadd.f32 %v820, %v836
    %v880 = vadd.f32 %v879, %v852
    %v881 = vadd.f32 %v821, %v837
    %v882 = vadd.f32 %v881, %v853
    %v883 = vadd.f32 %v822, %v838
    %v884 = vadd.f32 %v883, %v854
    %v885 = vadd.f32 %v823, %v839
    %v886 = vadd.f32 %v885, %v855
    %v887 = vadd.f32 %v824, %v840
    %v888 = vadd.f32 %v887, %v856
    %v889 = vmul.f32 %v858, %v200
    %v890 = vmul.f32 %v860, %v200
    %v891 = vmul.f32 %v862, %v200
    %v892 = vmul.f32 %v864, %v200
    %v893 = vmul.f32 %v866, %v200
    %v894 = vmul.f32 %v868, %v200
    %v895 = vmul.f32 %v870, %v200
    %v896 = vmul.f32 %v872, %v200
    %v897 = vmul.f32 %v874, %v200
    %v898 = vmul.f32 %v876, %v200
    %v899 = vmul.f32 %v878, %v200
    %v900 = vmul.f32 %v880, %v200
    %v901 = vmul.f32 %v882, %v200
    %v902 = vmul.f32 %v884, %v200
    %v903 = vmul.f32 %v886, %v200
    %v904 = vmul.f32 %v888, %v200
    %s905 = scalar_lea.vmem [#allocation4], 1152
    %v906 = vld [vmem:[%s905] sm:$0xff]
    %v907 = vld [vmem:[%s905 + $0x8] sm:$0xff]
    %v908 = vld [vmem:[%s905 + $0x10] sm:$0xff]
    %v909 = vld [vmem:[%s905 + $0x18] sm:$0xff]
    %v910 = vld [vmem:[%s905 + $0x20] sm:$0xff]
    %v911 = vld [vmem:[%s905 + $0x28] sm:$0xff]
    %v912 = vld [vmem:[%s905 + $0x30] sm:$0xff]
    %v913 = vld [vmem:[%s905 + $0x38] sm:$0xff]
    %v914 = vld [vmem:[%s905 + $0x40] sm:$0xff]
    %v915 = vld [vmem:[%s905 + $0x48] sm:$0xff]
    %v916 = vld [vmem:[%s905 + $0x50] sm:$0xff]
    %v917 = vld [vmem:[%s905 + $0x58] sm:$0xff]
    %v918 = vld [vmem:[%s905 + $0x60] sm:$0xff]
    %v919 = vld [vmem:[%s905 + $0x68] sm:$0xff]
    %v920 = vld [vmem:[%s905 + $0x70] sm:$0xff]
    %v921 = vld [vmem:[%s905 + $0x78] sm:$0xff]
    %v922 = vld [vmem:[%s905 + $0x80] sm:$0xff]
    %v923 = vld [vmem:[%s905 + $0x88] sm:$0xff]
    %v924 = vld [vmem:[%s905 + $0x90] sm:$0xff]
    %v925 = vld [vmem:[%s905 + $0x98] sm:$0xff]
    %v926 = vld [vmem:[%s905 + $0xa0] sm:$0xff]
    %v927 = vld [vmem:[%s905 + $0xa8] sm:$0xff]
    %v928 = vld [vmem:[%s905 + $0xb0] sm:$0xff]
    %v929 = vld [vmem:[%s905 + $0xb8] sm:$0xff]
    %v930 = vld [vmem:[%s905 + $0xc0] sm:$0xff]
    %v931 = vld [vmem:[%s905 + $0xc8] sm:$0xff]
    %v932 = vld [vmem:[%s905 + $0xd0] sm:$0xff]
    %v933 = vld [vmem:[%s905 + $0xd8] sm:$0xff]
    %v934 = vld [vmem:[%s905 + $0xe0] sm:$0xff]
    %v935 = vld [vmem:[%s905 + $0xe8] sm:$0xff]
    %v936 = vld [vmem:[%s905 + $0xf0] sm:$0xff]
    %v937 = vld [vmem:[%s905 + $0xf8] sm:$0xff]
    %v938 = vld [vmem:[%s905 + $0x100] sm:$0xff]
    %v939 = vld [vmem:[%s905 + $0x108] sm:$0xff]
    %v940 = vld [vmem:[%s905 + $0x110] sm:$0xff]
    %v941 = vld [vmem:[%s905 + $0x118] sm:$0xff]
    %v942 = vld [vmem:[%s905 + $0x120] sm:$0xff]
    %v943 = vld [vmem:[%s905 + $0x128] sm:$0xff]
    %v944 = vld [vmem:[%s905 + $0x130] sm:$0xff]
    %v945 = vld [vmem:[%s905 + $0x138] sm:$0xff]
    %v946 = vld [vmem:[%s905 + $0x140] sm:$0xff]
    %v947 = vld [vmem:[%s905 + $0x148] sm:$0xff]
    %v948 = vld [vmem:[%s905 + $0x150] sm:$0xff]
    %v949 = vld [vmem:[%s905 + $0x158] sm:$0xff]
    %v950 = vld [vmem:[%s905 + $0x160] sm:$0xff]
    %v951 = vld [vmem:[%s905 + $0x168] sm:$0xff]
    %v952 = vld [vmem:[%s905 + $0x170] sm:$0xff]
    %v953 = vld [vmem:[%s905 + $0x178] sm:$0xff]
    %v954 = vadd.f32 %v906, %v922
    %v955 = vadd.f32 %v954, %v938
    %v956 = vadd.f32 %v907, %v923
    %v957 = vadd.f32 %v956, %v939
    %v958 = vadd.f32 %v908, %v924
    %v959 = vadd.f32 %v958, %v940
    %v960 = vadd.f32 %v909, %v925
    %v961 = vadd.f32 %v960, %v941
    %v962 = vadd.f32 %v910, %v926
    %v963 = vadd.f32 %v962, %v942
    %v964 = vadd.f32 %v911, %v927
    %v965 = vadd.f32 %v964, %v943
    %v966 = vadd.f32 %v912, %v928
    %v967 = vadd.f32 %v966, %v944
    %v968 = vadd.f32 %v913, %v929
    %v969 = vadd.f32 %v968, %v945
    %v970 = vadd.f32 %v914, %v930
    %v971 = vadd.f32 %v970, %v946
    %v972 = vadd.f32 %v915, %v931
    %v973 = vadd.f32 %v972, %v947
    %v974 = vadd.f32 %v916, %v932
    %v975 = vadd.f32 %v974, %v948
    %v976 = vadd.f32 %v917, %v933
    %v977 = vadd.f32 %v976, %v949
    %v978 = vadd.f32 %v918, %v934
    %v979 = vadd.f32 %v978, %v950
    %v980 = vadd.f32 %v919, %v935
    %v981 = vadd.f32 %v980, %v951
    %v982 = vadd.f32 %v920, %v936
    %v983 = vadd.f32 %v982, %v952
    %v984 = vadd.f32 %v921, %v937
    %v985 = vadd.f32 %v984, %v953
    %v986 = vmul.f32 %v955, %v200
    %v987 = vmul.f32 %v957, %v200
    %v988 = vmul.f32 %v959, %v200
    %v989 = vmul.f32 %v961, %v200
    %v990 = vmul.f32 %v963, %v200
    %v991 = vmul.f32 %v965, %v200
    %v992 = vmul.f32 %v967, %v200
    %v993 = vmul.f32 %v969, %v200
    %v994 = vmul.f32 %v971, %v200
    %v995 = vmul.f32 %v973, %v200
    %v996 = vmul.f32 %v975, %v200
    %v997 = vmul.f32 %v977, %v200
    %v998 = vmul.f32 %v979, %v200
    %v999 = vmul.f32 %v981, %v200
    %v1000 = vmul.f32 %v983, %v200
    %v1001 = vmul.f32 %v985, %v200
    %s1002 = scalar_lea.vmem [#allocation7], 128
    %v1003 = vld [vmem:[%s1002] sm:$0xff]
    %v1004 = vld [vmem:[%s1002 + $0x8] sm:$0xff]
    %v1005 = vld [vmem:[%s1002 + $0x10] sm:$0xff]
    %v1006 = vld [vmem:[%s1002 + $0x18] sm:$0xff]
    %v1007 = vld [vmem:[%s1002 + $0x20] sm:$0xff]
    %v1008 = vld [vmem:[%s1002 + $0x28] sm:$0xff]
    %v1009 = vld [vmem:[%s1002 + $0x30] sm:$0xff]
    %v1010 = vld [vmem:[%s1002 + $0x38] sm:$0xff]
    %v1011 = vld [vmem:[%s1002 + $0x40] sm:$0xff]
    %v1012 = vld [vmem:[%s1002 + $0x48] sm:$0xff]
    %v1013 = vld [vmem:[%s1002 + $0x50] sm:$0xff]
    %v1014 = vld [vmem:[%s1002 + $0x58] sm:$0xff]
    %v1015 = vld [vmem:[%s1002 + $0x60] sm:$0xff]
    %v1016 = vld [vmem:[%s1002 + $0x68] sm:$0xff]
    %v1017 = vld [vmem:[%s1002 + $0x70] sm:$0xff]
    %v1018 = vld [vmem:[%s1002 + $0x78] sm:$0xff]
    %v1019 = vsub.f32 %v1003, %v889
    %v1020 = vsub.f32 %v1004, %v890
    %v1021 = vsub.f32 %v1005, %v891
    %v1022 = vsub.f32 %v1006, %v892
    %v1023 = vsub.f32 %v1007, %v893
    %v1024 = vsub.f32 %v1008, %v894
    %v1025 = vsub.f32 %v1009, %v895
    %v1026 = vsub.f32 %v1010, %v896
    %v1027 = vsub.f32 %v1011, %v897
    %v1028 = vsub.f32 %v1012, %v898
    %v1029 = vsub.f32 %v1013, %v899
    %v1030 = vsub.f32 %v1014, %v900
    %v1031 = vsub.f32 %v1015, %v901
    %v1032 = vsub.f32 %v1016, %v902
    %v1033 = vsub.f32 %v1017, %v903
    %v1034 = vsub.f32 %v1018, %v904
    %v1035 = vand.u32 2147483647, %v1019
    %v1036 = vand.u32 2147483647, %v1020
    %v1037 = vand.u32 2147483647, %v1021
    %v1038 = vand.u32 2147483647, %v1022
    %v1039 = vand.u32 2147483647, %v1023
    %v1040 = vand.u32 2147483647, %v1024
    %v1041 = vand.u32 2147483647, %v1025
    %v1042 = vand.u32 2147483647, %v1026
    %v1043 = vand.u32 2147483647, %v1027
    %v1044 = vand.u32 2147483647, %v1028
    %v1045 = vand.u32 2147483647, %v1029
    %v1046 = vand.u32 2147483647, %v1030
    %v1047 = vand.u32 2147483647, %v1031
    %v1048 = vand.u32 2147483647, %v1032
    %v1049 = vand.u32 2147483647, %v1033
    %v1050 = vand.u32 2147483647, %v1034
    %s1051 = scalar_lea.vmem [#allocation9], 128
    %v1052 = vld [vmem:[%s1051] sm:$0xff]
    %v1053 = vld [vmem:[%s1051 + $0x8] sm:$0xff]
    %v1054 = vld [vmem:[%s1051 + $0x10] sm:$0xff]
    %v1055 = vld [vmem:[%s1051 + $0x18] sm:$0xff]
    %v1056 = vld [vmem:[%s1051 + $0x20] sm:$0xff]
    %v1057 = vld [vmem:[%s1051 + $0x28] sm:$0xff]
    %v1058 = vld [vmem:[%s1051 + $0x30] sm:$0xff]
    %v1059 = vld [vmem:[%s1051 + $0x38] sm:$0xff]
    %v1060 = vld [vmem:[%s1051 + $0x40] sm:$0xff]
    %v1061 = vld [vmem:[%s1051 + $0x48] sm:$0xff]
    %v1062 = vld [vmem:[%s1051 + $0x50] sm:$0xff]
    %v1063 = vld [vmem:[%s1051 + $0x58] sm:$0xff]
    %v1064 = vld [vmem:[%s1051 + $0x60] sm:$0xff]
    %v1065 = vld [vmem:[%s1051 + $0x68] sm:$0xff]
    %v1066 = vld [vmem:[%s1051 + $0x70] sm:$0xff]
    %v1067 = vld [vmem:[%s1051 + $0x78] sm:$0xff]
    %s1068 = sadd.s32 %s119, 1
    %s1069 = sld [smem:[#allocation3 + %s1068]]
    %v1070 = vstv %s1069
    %v1071 = vmul.f32 %v1052, %v1070
    %v1072 = vmul.f32 %v1053, %v1070
    %v1073 = vmul.f32 %v1054, %v1070
    %v1074 = vmul.f32 %v1055, %v1070
    %v1075 = vmul.f32 %v1056, %v1070
    %v1076 = vmul.f32 %v1057, %v1070
    %v1077 = vmul.f32 %v1058, %v1070
    %v1078 = vmul.f32 %v1059, %v1070
    %v1079 = vmul.f32 %v1060, %v1070
    %v1080 = vmul.f32 %v1061, %v1070
    %v1081 = vmul.f32 %v1062, %v1070
    %v1082 = vmul.f32 %v1063, %v1070
    %v1083 = vmul.f32 %v1064, %v1070
    %v1084 = vmul.f32 %v1065, %v1070
    %v1085 = vmul.f32 %v1066, %v1070
    %v1086 = vmul.f32 %v1067, %v1070
    %v1087 = vmul.f32 %v986, %v1071
    %v1088 = vmul.f32 %v987, %v1072
    %v1089 = vmul.f32 %v988, %v1073
    %v1090 = vmul.f32 %v989, %v1074
    %v1091 = vmul.f32 %v990, %v1075
    %v1092 = vmul.f32 %v991, %v1076
    %v1093 = vmul.f32 %v992, %v1077
    %v1094 = vmul.f32 %v993, %v1078
    %v1095 = vmul.f32 %v994, %v1079
    %v1096 = vmul.f32 %v995, %v1080
    %v1097 = vmul.f32 %v996, %v1081
    %v1098 = vmul.f32 %v997, %v1082
    %v1099 = vmul.f32 %v998, %v1083
    %v1100 = vmul.f32 %v999, %v1084
    %v1101 = vmul.f32 %v1000, %v1085
    %v1102 = vmul.f32 %v1001, %v1086
    %v1103 = vadd.f32 %v1035, %v1036
    %v1104 = vadd.f32 %v1103, %v1037
    %v1105 = vadd.f32 %v1104, %v1038
    %v1106 = vadd.f32 %v1105, %v1039
    %v1107 = vadd.f32 %v1106, %v1040
    %v1108 = vadd.f32 %v1107, %v1041
    %v1109 = vadd.f32 %v1108, %v1042
    %v1110 = vadd.f32 %v1109, %v1043
    %v1111 = vadd.f32 %v1110, %v1044
    %v1112 = vadd.f32 %v1111, %v1045
    %v1113 = vadd.f32 %v1112, %v1046
    %v1114 = vadd.f32 %v1113, %v1047
    %v1115 = vadd.f32 %v1114, %v1048
    %v1116 = vadd.f32 %v1115, %v1049
    %v1117 = vadd.f32 %v1116, %v1050
    %1118 = vadd.xlane.f32.xlu0 %v1117
    %v1119 = vpop.xlane.xlu0 %1118
    %v1120 = vrot.slane %v1119, 4
    %v1121 = vadd.f32 %v1119, %v1120
    %v1122 = vrot.slane %v1121, 2
    %v1123 = vadd.f32 %v1121, %v1122
    %v1124 = vrot.slane %v1123, 1
    %v1125 = vadd.f32 %v1123, %v1124
    %s1126 = vtos %v1125
    %s1127 = smul.f32 %s1126, 6.1035156e-05
    %s1128 = scalar_lea.smem [#allocation13], 128
    %1129 = sst [smem:[%s1128]] %s1127
    %v1130 = vadd.f32 %v1087, %v1088
    %v1131 = vadd.f32 %v1130, %v1089
    %v1132 = vadd.f32 %v1131, %v1090
    %v1133 = vadd.f32 %v1132, %v1091
    %v1134 = vadd.f32 %v1133, %v1092
    %v1135 = vadd.f32 %v1134, %v1093
    %v1136 = vadd.f32 %v1135, %v1094
    %v1137 = vadd.f32 %v1136, %v1095
    %v1138 = vadd.f32 %v1137, %v1096
    %v1139 = vadd.f32 %v1138, %v1097
    %v1140 = vadd.f32 %v1139, %v1098
    %v1141 = vadd.f32 %v1140, %v1099
    %v1142 = vadd.f32 %v1141, %v1100
    %v1143 = vadd.f32 %v1142, %v1101
    %v1144 = vadd.f32 %v1143, %v1102
    %1145 = vadd.xlane.f32.xlu0 %v1144
    %v1146 = vpop.xlane.xlu0 %1145
    %v1147 = vrot.slane %v1146, 4
    %v1148 = vadd.f32 %v1146, %v1147
    %v1149 = vrot.slane %v1148, 2
    %v1150 = vadd.f32 %v1148, %v1149
    %v1151 = vrot.slane %v1150, 1
    %v1152 = vadd.f32 %v1150, %v1151
    %s1153 = vtos %v1152
    %s1154 = smul.f32 %s1153, 6.1035156e-05
    %s1155 = scalar_lea.smem [#allocation13], 129
    %1156 = sst [smem:[%s1155]] %s1154
    %s1157 = scalar_lea.vmem [#allocation10], 128
    %v1158 = vld [vmem:[%s1157] sm:$0xff]
    %v1159 = vld [vmem:[%s1157 + $0x8] sm:$0xff]
    %v1160 = vld [vmem:[%s1157 + $0x10] sm:$0xff]
    %v1161 = vld [vmem:[%s1157 + $0x18] sm:$0xff]
    %v1162 = vld [vmem:[%s1157 + $0x20] sm:$0xff]
    %v1163 = vld [vmem:[%s1157 + $0x28] sm:$0xff]
    %v1164 = vld [vmem:[%s1157 + $0x30] sm:$0xff]
    %v1165 = vld [vmem:[%s1157 + $0x38] sm:$0xff]
    %v1166 = vld [vmem:[%s1157 + $0x40] sm:$0xff]
    %v1167 = vld [vmem:[%s1157 + $0x48] sm:$0xff]
    %v1168 = vld [vmem:[%s1157 + $0x50] sm:$0xff]
    %v1169 = vld [vmem:[%s1157 + $0x58] sm:$0xff]
    %v1170 = vld [vmem:[%s1157 + $0x60] sm:$0xff]
    %v1171 = vld [vmem:[%s1157 + $0x68] sm:$0xff]
    %v1172 = vld [vmem:[%s1157 + $0x70] sm:$0xff]
    %v1173 = vld [vmem:[%s1157 + $0x78] sm:$0xff]
    %v1174 = vmul.f32 %v1158, -0.25
    %v1175 = vmul.f32 %v1159, -0.25
    %v1176 = vmul.f32 %v1160, -0.25
    %v1177 = vmul.f32 %v1161, -0.25
    %v1178 = vmul.f32 %v1162, -0.25
    %v1179 = vmul.f32 %v1163, -0.25
    %v1180 = vmul.f32 %v1164, -0.25
    %v1181 = vmul.f32 %v1165, -0.25
    %v1182 = vmul.f32 %v1166, -0.25
    %v1183 = vmul.f32 %v1167, -0.25
    %v1184 = vmul.f32 %v1168, -0.25
    %v1185 = vmul.f32 %v1169, -0.25
    %v1186 = vmul.f32 %v1170, -0.25
    %v1187 = vmul.f32 %v1171, -0.25
    %v1188 = vmul.f32 %v1172, -0.25
    %v1189 = vmul.f32 %v1173, -0.25
    %v1190 = vtanh.pop %v1174
    %v1191 = vtanh.pop %v1175
    %v1192 = vtanh.pop %v1176
    %v1193 = vtanh.pop %v1177
    %v1194 = vtanh.pop %v1178
    %v1195 = vtanh.pop %v1179
    %v1196 = vtanh.pop %v1180
    %v1197 = vtanh.pop %v1181
    %v1198 = vtanh.pop %v1182
    %v1199 = vtanh.pop %v1183
    %v1200 = vtanh.pop %v1184
    %v1201 = vtanh.pop %v1185
    %v1202 = vtanh.pop %v1186
    %v1203 = vtanh.pop %v1187
    %v1204 = vtanh.pop %v1188
    %v1205 = vtanh.pop %v1189
    %v1206 = vadd.f32 %v1190, 1.0
    %v1207 = vadd.f32 %v1191, 1.0
    %v1208 = vadd.f32 %v1192, 1.0
    %v1209 = vadd.f32 %v1193, 1.0
    %v1210 = vadd.f32 %v1194, 1.0
    %v1211 = vadd.f32 %v1195, 1.0
    %v1212 = vadd.f32 %v1196, 1.0
    %v1213 = vadd.f32 %v1197, 1.0
    %v1214 = vadd.f32 %v1198, 1.0
    %v1215 = vadd.f32 %v1199, 1.0
    %v1216 = vadd.f32 %v1200, 1.0
    %v1217 = vadd.f32 %v1201, 1.0
    %v1218 = vadd.f32 %v1202, 1.0
    %v1219 = vadd.f32 %v1203, 1.0
    %v1220 = vadd.f32 %v1204, 1.0
    %v1221 = vadd.f32 %v1205, 1.0
    %v1222 = vmul.f32 %v1206, 0.5
    %v1223 = vmul.f32 %v1207, 0.5
    %v1224 = vmul.f32 %v1208, 0.5
    %v1225 = vmul.f32 %v1209, 0.5
    %v1226 = vmul.f32 %v1210, 0.5
    %v1227 = vmul.f32 %v1211, 0.5
    %v1228 = vmul.f32 %v1212, 0.5
    %v1229 = vmul.f32 %v1213, 0.5
    %v1230 = vmul.f32 %v1214, 0.5
    %v1231 = vmul.f32 %v1215, 0.5
    %v1232 = vmul.f32 %v1216, 0.5
    %v1233 = vmul.f32 %v1217, 0.5
    %v1234 = vmul.f32 %v1218, 0.5
    %v1235 = vmul.f32 %v1219, 0.5
    %v1236 = vmul.f32 %v1220, 0.5
    %v1237 = vmul.f32 %v1221, 0.5
    %v1238 = vmul.f32 %v1035, %v1222
    %v1239 = vmul.f32 %v1036, %v1223
    %v1240 = vmul.f32 %v1037, %v1224
    %v1241 = vmul.f32 %v1038, %v1225
    %v1242 = vmul.f32 %v1039, %v1226
    %v1243 = vmul.f32 %v1040, %v1227
    %v1244 = vmul.f32 %v1041, %v1228
    %v1245 = vmul.f32 %v1042, %v1229
    %v1246 = vmul.f32 %v1043, %v1230
    %v1247 = vmul.f32 %v1044, %v1231
    %v1248 = vmul.f32 %v1045, %v1232
    %v1249 = vmul.f32 %v1046, %v1233
    %v1250 = vmul.f32 %v1047, %v1234
    %v1251 = vmul.f32 %v1048, %v1235
    %v1252 = vmul.f32 %v1049, %v1236
    %v1253 = vmul.f32 %v1050, %v1237
    %v1254 = vlog2.pop %v1222
    %v1255 = vmul.f32 %v1254, 0.6931472
    %v1256 = vlog2.pop %v1223
    %v1257 = vmul.f32 %v1256, 0.6931472
    %v1258 = vlog2.pop %v1224
    %v1259 = vmul.f32 %v1258, 0.6931472
    %v1260 = vlog2.pop %v1225
    %v1261 = vmul.f32 %v1260, 0.6931472
    %v1262 = vlog2.pop %v1226
    %v1263 = vmul.f32 %v1262, 0.6931472
    %v1264 = vlog2.pop %v1227
    %v1265 = vmul.f32 %v1264, 0.6931472
    %v1266 = vlog2.pop %v1228
    %v1267 = vmul.f32 %v1266, 0.6931472
    %v1268 = vlog2.pop %v1229
    %v1269 = vmul.f32 %v1268, 0.6931472
    %v1270 = vlog2.pop %v1230
    %v1271 = vmul.f32 %v1270, 0.6931472
    %v1272 = vlog2.pop %v1231
    %v1273 = vmul.f32 %v1272, 0.6931472
    %v1274 = vlog2.pop %v1232
    %v1275 = vmul.f32 %v1274, 0.6931472
    %v1276 = vlog2.pop %v1233
    %v1277 = vmul.f32 %v1276, 0.6931472
    %v1278 = vlog2.pop %v1234
    %v1279 = vmul.f32 %v1278, 0.6931472
    %v1280 = vlog2.pop %v1235
    %v1281 = vmul.f32 %v1280, 0.6931472
    %v1282 = vlog2.pop %v1236
    %v1283 = vmul.f32 %v1282, 0.6931472
    %v1284 = vlog2.pop %v1237
    %v1285 = vmul.f32 %v1284, 0.6931472
    %v1286 = vsub.f32 %v1238, %v1255
    %v1287 = vsub.f32 %v1239, %v1257
    %v1288 = vsub.f32 %v1240, %v1259
    %v1289 = vsub.f32 %v1241, %v1261
    %v1290 = vsub.f32 %v1242, %v1263
    %v1291 = vsub.f32 %v1243, %v1265
    %v1292 = vsub.f32 %v1244, %v1267
    %v1293 = vsub.f32 %v1245, %v1269
    %v1294 = vsub.f32 %v1246, %v1271
    %v1295 = vsub.f32 %v1247, %v1273
    %v1296 = vsub.f32 %v1248, %v1275
    %v1297 = vsub.f32 %v1249, %v1277
    %v1298 = vsub.f32 %v1250, %v1279
    %v1299 = vsub.f32 %v1251, %v1281
    %v1300 = vsub.f32 %v1252, %v1283
    %v1301 = vsub.f32 %v1253, %v1285
    %v1302 = vadd.f32 %v1286, %v1287
    %v1303 = vadd.f32 %v1302, %v1288
    %v1304 = vadd.f32 %v1303, %v1289
    %v1305 = vadd.f32 %v1304, %v1290
    %v1306 = vadd.f32 %v1305, %v1291
    %v1307 = vadd.f32 %v1306, %v1292
    %v1308 = vadd.f32 %v1307, %v1293
    %v1309 = vadd.f32 %v1308, %v1294
    %v1310 = vadd.f32 %v1309, %v1295
    %v1311 = vadd.f32 %v1310, %v1296
    %v1312 = vadd.f32 %v1311, %v1297
    %v1313 = vadd.f32 %v1312, %v1298
    %v1314 = vadd.f32 %v1313, %v1299
    %v1315 = vadd.f32 %v1314, %v1300
    %v1316 = vadd.f32 %v1315, %v1301
    %1317 = vadd.xlane.f32.xlu0 %v1316
    %v1318 = vpop.xlane.xlu0 %1317
    %v1319 = vrot.slane %v1318, 4
    %v1320 = vadd.f32 %v1318, %v1319
    %v1321 = vrot.slane %v1320, 2
    %v1322 = vadd.f32 %v1320, %v1321
    %v1323 = vrot.slane %v1322, 1
    %v1324 = vadd.f32 %v1322, %v1323
    %s1325 = vtos %v1324
    %s1326 = smul.f32 %s1325, 6.1035156e-05
    %s1327 = scalar_lea.smem [#allocation13], 130
    %1328 = sst [smem:[%s1327]] %s1326
    %s1329 = scalar_lea.vmem [#allocation12], 128
    %v1330 = vld [vmem:[%s1329] sm:$0xff]
    %v1331 = vld [vmem:[%s1329 + $0x8] sm:$0xff]
    %v1332 = vld [vmem:[%s1329 + $0x10] sm:$0xff]
    %v1333 = vld [vmem:[%s1329 + $0x18] sm:$0xff]
    %v1334 = vld [vmem:[%s1329 + $0x20] sm:$0xff]
    %v1335 = vld [vmem:[%s1329 + $0x28] sm:$0xff]
    %v1336 = vld [vmem:[%s1329 + $0x30] sm:$0xff]
    %v1337 = vld [vmem:[%s1329 + $0x38] sm:$0xff]
    %v1338 = vld [vmem:[%s1329 + $0x40] sm:$0xff]
    %v1339 = vld [vmem:[%s1329 + $0x48] sm:$0xff]
    %v1340 = vld [vmem:[%s1329 + $0x50] sm:$0xff]
    %v1341 = vld [vmem:[%s1329 + $0x58] sm:$0xff]
    %v1342 = vld [vmem:[%s1329 + $0x60] sm:$0xff]
    %v1343 = vld [vmem:[%s1329 + $0x68] sm:$0xff]
    %v1344 = vld [vmem:[%s1329 + $0x70] sm:$0xff]
    %v1345 = vld [vmem:[%s1329 + $0x78] sm:$0xff]
    %v1346 = vmul.f32 %v1330, -0.25
    %v1347 = vmul.f32 %v1331, -0.25
    %v1348 = vmul.f32 %v1332, -0.25
    %v1349 = vmul.f32 %v1333, -0.25
    %v1350 = vmul.f32 %v1334, -0.25
    %v1351 = vmul.f32 %v1335, -0.25
    %v1352 = vmul.f32 %v1336, -0.25
    %v1353 = vmul.f32 %v1337, -0.25
    %v1354 = vmul.f32 %v1338, -0.25
    %v1355 = vmul.f32 %v1339, -0.25
    %v1356 = vmul.f32 %v1340, -0.25
    %v1357 = vmul.f32 %v1341, -0.25
    %v1358 = vmul.f32 %v1342, -0.25
    %v1359 = vmul.f32 %v1343, -0.25
    %v1360 = vmul.f32 %v1344, -0.25
    %v1361 = vmul.f32 %v1345, -0.25
    %v1362 = vtanh.pop %v1346
    %v1363 = vtanh.pop %v1347
    %v1364 = vtanh.pop %v1348
    %v1365 = vtanh.pop %v1349
    %v1366 = vtanh.pop %v1350
    %v1367 = vtanh.pop %v1351
    %v1368 = vtanh.pop %v1352
    %v1369 = vtanh.pop %v1353
    %v1370 = vtanh.pop %v1354
    %v1371 = vtanh.pop %v1355
    %v1372 = vtanh.pop %v1356
    %v1373 = vtanh.pop %v1357
    %v1374 = vtanh.pop %v1358
    %v1375 = vtanh.pop %v1359
    %v1376 = vtanh.pop %v1360
    %v1377 = vtanh.pop %v1361
    %v1378 = vadd.f32 %v1362, 1.0
    %v1379 = vadd.f32 %v1363, 1.0
    %v1380 = vadd.f32 %v1364, 1.0
    %v1381 = vadd.f32 %v1365, 1.0
    %v1382 = vadd.f32 %v1366, 1.0
    %v1383 = vadd.f32 %v1367, 1.0
    %v1384 = vadd.f32 %v1368, 1.0
    %v1385 = vadd.f32 %v1369, 1.0
    %v1386 = vadd.f32 %v1370, 1.0
    %v1387 = vadd.f32 %v1371, 1.0
    %v1388 = vadd.f32 %v1372, 1.0
    %v1389 = vadd.f32 %v1373, 1.0
    %v1390 = vadd.f32 %v1374, 1.0
    %v1391 = vadd.f32 %v1375, 1.0
    %v1392 = vadd.f32 %v1376, 1.0
    %v1393 = vadd.f32 %v1377, 1.0
    %v1394 = vmul.f32 %v1378, 0.5
    %v1395 = vmul.f32 %v1379, 0.5
    %v1396 = vmul.f32 %v1380, 0.5
    %v1397 = vmul.f32 %v1381, 0.5
    %v1398 = vmul.f32 %v1382, 0.5
    %v1399 = vmul.f32 %v1383, 0.5
    %v1400 = vmul.f32 %v1384, 0.5
    %v1401 = vmul.f32 %v1385, 0.5
    %v1402 = vmul.f32 %v1386, 0.5
    %v1403 = vmul.f32 %v1387, 0.5
    %v1404 = vmul.f32 %v1388, 0.5
    %v1405 = vmul.f32 %v1389, 0.5
    %v1406 = vmul.f32 %v1390, 0.5
    %v1407 = vmul.f32 %v1391, 0.5
    %v1408 = vmul.f32 %v1392, 0.5
    %v1409 = vmul.f32 %v1393, 0.5
    %v1410 = vmul.f32 %v1087, %v1394
    %v1411 = vmul.f32 %v1088, %v1395
    %v1412 = vmul.f32 %v1089, %v1396
    %v1413 = vmul.f32 %v1090, %v1397
    %v1414 = vmul.f32 %v1091, %v1398
    %v1415 = vmul.f32 %v1092, %v1399
    %v1416 = vmul.f32 %v1093, %v1400
    %v1417 = vmul.f32 %v1094, %v1401
    %v1418 = vmul.f32 %v1095, %v1402
    %v1419 = vmul.f32 %v1096, %v1403
    %v1420 = vmul.f32 %v1097, %v1404
    %v1421 = vmul.f32 %v1098, %v1405
    %v1422 = vmul.f32 %v1099, %v1406
    %v1423 = vmul.f32 %v1100, %v1407
    %v1424 = vmul.f32 %v1101, %v1408
    %v1425 = vmul.f32 %v1102, %v1409
    %v1426 = vlog2.pop %v1394
    %v1427 = vmul.f32 %v1426, 0.6931472
    %v1428 = vlog2.pop %v1395
    %v1429 = vmul.f32 %v1428, 0.6931472
    %v1430 = vlog2.pop %v1396
    %v1431 = vmul.f32 %v1430, 0.6931472
    %v1432 = vlog2.pop %v1397
    %v1433 = vmul.f32 %v1432, 0.6931472
    %v1434 = vlog2.pop %v1398
    %v1435 = vmul.f32 %v1434, 0.6931472
    %v1436 = vlog2.pop %v1399
    %v1437 = vmul.f32 %v1436, 0.6931472
    %v1438 = vlog2.pop %v1400
    %v1439 = vmul.f32 %v1438, 0.6931472
    %v1440 = vlog2.pop %v1401
    %v1441 = vmul.f32 %v1440, 0.6931472
    %v1442 = vlog2.pop %v1402
    %v1443 = vmul.f32 %v1442, 0.6931472
    %v1444 = vlog2.pop %v1403
    %v1445 = vmul.f32 %v1444, 0.6931472
    %v1446 = vlog2.pop %v1404
    %v1447 = vmul.f32 %v1446, 0.6931472
    %v1448 = vlog2.pop %v1405
    %v1449 = vmul.f32 %v1448, 0.6931472
    %v1450 = vlog2.pop %v1406
    %v1451 = vmul.f32 %v1450, 0.6931472
    %v1452 = vlog2.pop %v1407
    %v1453 = vmul.f32 %v1452, 0.6931472
    %v1454 = vlog2.pop %v1408
    %v1455 = vmul.f32 %v1454, 0.6931472
    %v1456 = vlog2.pop %v1409
    %v1457 = vmul.f32 %v1456, 0.6931472
    %v1458 = vsub.f32 %v1410, %v1427
    %v1459 = vsub.f32 %v1411, %v1429
    %v1460 = vsub.f32 %v1412, %v1431
    %v1461 = vsub.f32 %v1413, %v1433
    %v1462 = vsub.f32 %v1414, %v1435
    %v1463 = vsub.f32 %v1415, %v1437
    %v1464 = vsub.f32 %v1416, %v1439
    %v1465 = vsub.f32 %v1417, %v1441
    %v1466 = vsub.f32 %v1418, %v1443
    %v1467 = vsub.f32 %v1419, %v1445
    %v1468 = vsub.f32 %v1420, %v1447
    %v1469 = vsub.f32 %v1421, %v1449
    %v1470 = vsub.f32 %v1422, %v1451
    %v1471 = vsub.f32 %v1423, %v1453
    %v1472 = vsub.f32 %v1424, %v1455
    %v1473 = vsub.f32 %v1425, %v1457
    %v1474 = vadd.f32 %v1458, %v1459
    %v1475 = vadd.f32 %v1474, %v1460
    %v1476 = vadd.f32 %v1475, %v1461
    %v1477 = vadd.f32 %v1476, %v1462
    %v1478 = vadd.f32 %v1477, %v1463
    %v1479 = vadd.f32 %v1478, %v1464
    %v1480 = vadd.f32 %v1479, %v1465
    %v1481 = vadd.f32 %v1480, %v1466
    %v1482 = vadd.f32 %v1481, %v1467
    %v1483 = vadd.f32 %v1482, %v1468
    %v1484 = vadd.f32 %v1483, %v1469
    %v1485 = vadd.f32 %v1484, %v1470
    %v1486 = vadd.f32 %v1485, %v1471
    %v1487 = vadd.f32 %v1486, %v1472
    %v1488 = vadd.f32 %v1487, %v1473
    %1489 = vadd.xlane.f32.xlu0 %v1488
    %v1490 = vpop.xlane.xlu0 %1489
    %v1491 = vrot.slane %v1490, 4
    %v1492 = vadd.f32 %v1490, %v1491
    %v1493 = vrot.slane %v1492, 2
    %v1494 = vadd.f32 %v1492, %v1493
    %v1495 = vrot.slane %v1494, 1
    %v1496 = vadd.f32 %v1494, %v1495
    %s1497 = vtos %v1496
    %s1498 = smul.f32 %s1497, 6.1035156e-05
    %s1499 = scalar_lea.smem [#allocation13], 131
    %1500 = sst [smem:[%s1499]] %s1498
    // Predicated region
    $region42: #{tpu_custom_call.1} parent=1 // pred_check
      _
    $region43: #{tpu_custom_call.1} parent=1 // pred_check_branch
      %1502 = sbr.rel (0) target = $region45
    $region44: #{tpu_custom_call.1} parent=1 // pred_region
      %s1504 = ssub.s32 32, 32
      %1505 = vsyncadd [#allocation6], %s1504
      %1508 = dma.smem_to_hbm [#allocation13], 32, %s6, [#allocation6]
    $region45: #{tpu_custom_call.1} parent=1 // pred_fallthru
      _
    // Predicated region
    $region46: #{tpu_custom_call.1} parent=1 // pred_check
      _
    $region47: #{tpu_custom_call.1} parent=1 // pred_check_branch
      %1510 = sbr.rel (0) target = $region49
    $region48: #{tpu_custom_call.1} parent=1 // pred_region
      %1511 = dma.done [#allocation6], 32
    $region49: #{tpu_custom_call.1} parent=1 // pred_fallthru
      _
    %1512 = sfence
    %1513 = vsyncpa [#allocation5], 1
    %1514 = vsyncpa [#allocation8], 1
    %1515 = vsyncpa [#allocation11], 1
    %1516 = vsyncpa [#allocation6], 1

</llo_original>
